<compile_context>
chip_gen: v6e
topology: v6e:2x2x1
jax: 0.10.0
libtpu: 0.0.40
codegen_flags: <defaults>
</compile_context>

<pallas_src>
from functools import partial

import jax
import jax.numpy as jnp
from jax.experimental import pallas as pl
from jax.experimental.pallas import tpu as pltpu

# ---------------------------------------------------------------------------
# Stand-ins for the module-level config object `mc`
# ---------------------------------------------------------------------------
MC_SIZE = 16           # mc.size        (image spatial size)
MC_TEXT_LEN = 32       # mc.text_len
MC_SURVIVALS_LEN = 4   # mc.survivals_len
MC_BATCH_SIZE = 4      # mc.batch_size (chunk loop not needed: per-slice encoder)

IMG_FEAT_CH = 32       # image_feature_channel (ResNetEncoder output channels)
TXT_FEAT_CH = 16       # text_feature_channel  (TextEncoder output channels)
KH = KW = 3            # encoder conv kernel size

# Packed small-output row layout (one lane-dense 128-lane store).
PACK_W = 128
_PI0, _PI1 = 0, MC_SURVIVALS_LEN               # predicted_survivals_from_image
_TF0, _TF1 = _PI1, _PI1 + TXT_FEAT_CH          # text_feature
_PT0, _PT1 = _TF1, _TF1 + 1                    # predicted_survivals_from_text

_VMEM = pl.BlockSpec(memory_space=pltpu.MemorySpace.VMEM)
_SMEM = pl.BlockSpec(memory_space=pltpu.MemorySpace.SMEM)


# ---------------------------------------------------------------------------
# In-kernel branch computations (operate on VMEM-resident values)
# ---------------------------------------------------------------------------
def _image_branch(n, patches_t, w_conv, b_conv, w_fci, b_fci, w_surv, b_surv,
                  *, n_pad, pix):
    """Image encoder + fc_image + zero-supplement + fc_survivals.

    patches_t : (9, n_pad*pix) bf16 im2col patches, taps on sublanes,
                pixels lane-dense.
    Returns (image_feature (n_pad, C), predicted_survivals_from_image (1, S)).
    """
    # 3x3 conv as ONE bf16 MXU matmul (f32 accumulation), bias + ReLU on VPU.
    y = jnp.dot(w_conv, patches_t, preferred_element_type=jnp.float32)   # (C, n_pad*pix)
    y = jnp.maximum(y + b_conv, 0.0)
    # Global average pool: per-slice aligned lane-window reduces (XLU),
    # replacing the old lane-sparse pool matmul operand.
    cols = [jnp.sum(y[:, s * pix:(s + 1) * pix], axis=1, keepdims=True)
            for s in range(n_pad)]
    feat_cn = jnp.concatenate(cols, axis=1) * (1.0 / pix)                # (C, n_pad)
    # fc_image: Linear(C -> 1) + ReLU, row-wise -> already the [1, n_pad] layout.
    surv = jnp.dot(w_fci, feat_cn, preferred_element_type=jnp.float32) + b_fci
    surv = jnp.maximum(surv, 0.0)                                        # (1, n_pad)
    # Zero-supplement for padded (invalid) slices == torch.cat with zeros.
    lane = jax.lax.broadcasted_iota(jnp.int32, surv.shape, 1)
    surv = jnp.where(lane < n, surv, 0.0)
    # fc_survivals: Linear(n_pad -> survivals_len) + Sigmoid.
    logits = jnp.dot(surv, w_surv, preferred_element_type=jnp.float32) + b_surv
    pred = 1.0 / (1.0 + jnp.exp(-logits))                                # (1, S)
    # Emit features already in (n_pad, C) orientation (tiny in-kernel transpose).
    return feat_cn.T, pred


def _text_branch(text, w_te, b_te, w_fct, b_fct):
    """Text encoder (Linear+ReLU stand-in) + fc_text (Linear+ReLU)."""
    tf = jnp.maximum(jnp.dot(text, w_te, preferred_element_type=jnp.float32) + b_te, 0.0)
    pt = jnp.maximum(jnp.dot(tf, w_fct, preferred_element_type=jnp.float32) + b_fct, 0.0)
    return tf, pt


# ---------------------------------------------------------------------------
# Pallas kernel bodies (grid-less: one invocation, whole arrays in VMEM/SMEM)
# ---------------------------------------------------------------------------
def _fused_kernel(n_ref, patches_ref, wconv_ref, bconv_ref, fciw_ref, fcib_ref,
                  survw_ref, survb_ref, text_ref, tew_ref, teb_ref, fctw_ref,
                  fctb_ref, feat_out, packed_out, *, n_pad, pix):
    feat_nc, pred_img = _image_branch(
        n_ref[0], patches_ref[...], wconv_ref[...], bconv_ref[...],
        fciw_ref[...], fcib_ref[...], survw_ref[...], survb_ref[...],
        n_pad=n_pad, pix=pix)
    tf, pt = _text_branch(text_ref[...], tew_ref[...], teb_ref[...],
                          fctw_ref[...], fctb_ref[...])
    feat_out[...] = feat_nc
    tail = jnp.zeros((1, PACK_W - _PT1), jnp.float32)
    packed_out[...] = jnp.concatenate([pred_img, tf, pt, tail], axis=1)


def _image_kernel(n_ref, patches_ref, wconv_ref, bconv_ref, fciw_ref, fcib_ref,
                  survw_ref, survb_ref, feat_out, packed_out, *, n_pad, pix):
    feat_nc, pred_img = _image_branch(
        n_ref[0], patches_ref[...], wconv_ref[...], bconv_ref[...],
        fciw_ref[...], fcib_ref[...], survw_ref[...], survb_ref[...],
        n_pad=n_pad, pix=pix)
    feat_out[...] = feat_nc
    tail = jnp.zeros((1, PACK_W - _PI1), jnp.float32)
    packed_out[...] = jnp.concatenate([pred_img, tail], axis=1)


def _text_kernel(text_ref, tew_ref, teb_ref, fctw_ref, fctb_ref, packed_out):
    tf, pt = _text_branch(text_ref[...], tew_ref[...], teb_ref[...],
                          fctw_ref[...], fctb_ref[...])
    head = jnp.zeros((1, _TF0), jnp.float32)
    tail = jnp.zeros((1, PACK_W - _PT1), jnp.float32)
    packed_out[...] = jnp.concatenate([head, tf, pt, tail], axis=1)


# ---------------------------------------------------------------------------
# Operand preparation (runs inside jit; all shapes static in n_pad)
# ---------------------------------------------------------------------------
def _img_operands(params, img_pad, n_arr, n_pad):
    H = W = MC_SIZE
    pix = H * W
    # 'same' conv padding + im2col in channel-major layout:
    # taps on sublanes, pixels lane-dense.  bf16 operands, f32 accumulation.
    xp = jnp.pad(img_pad, ((0, 0), (1, 1), (1, 1)))                      # (n_pad, H+2, W+2)
    cols = [xp[:, dy:dy + H, dx:dx + W].reshape(1, n_pad * pix)
            for dy in range(KH) for dx in range(KW)]
    patches_t = jnp.concatenate(cols, axis=0).astype(jnp.bfloat16)       # (9, n_pad*pix)
    ops = (n_arr,
           patches_t,
           params["conv_w"].reshape(IMG_FEAT_CH, KH * KW).astype(jnp.bfloat16),
           params["conv_b"].reshape(IMG_FEAT_CH, 1),
           params["fc_image_w"].reshape(1, IMG_FEAT_CH),
           params["fc_image_b"].reshape(1, 1),
           params["fc_surv_w"],
           params["fc_surv_b"].reshape(1, MC_SURVIVALS_LEN))
    specs = [_SMEM] + [_VMEM] * 7
    return ops, specs


def _text_operands(params, text):
    ops = (text,
           params["te_w"],
           params["te_b"].reshape(1, TXT_FEAT_CH),
           params["fc_text_w"],
           params["fc_text_b"].reshape(1, 1))
    specs = [_VMEM] * 5
    return ops, specs


# ---------------------------------------------------------------------------
# Jitted inner forwards (fixed shapes -> one compile per max_valid_slice_num)
# ---------------------------------------------------------------------------
@partial(jax.jit, static_argnums=(1,))
def _forward_fused(params, n_pad, img_pad, n_arr, text):
    pix = MC_SIZE * MC_SIZE
    img_ops, img_specs = _img_operands(params, img_pad, n_arr, n_pad)
    txt_ops, txt_specs = _text_operands(params, text)
    feat, packed = pl.pallas_call(
        partial(_fused_kernel, n_pad=n_pad, pix=pix),
        out_shape=(jax.ShapeDtypeStruct((n_pad, IMG_FEAT_CH), jnp.float32),
                   jax.ShapeDtypeStruct((1, PACK_W), jnp.float32)),
        in_specs=img_specs + txt_specs,
        out_specs=(_VMEM, _VMEM),
    )(*img_ops, *txt_ops)
    return (feat, packed[:, _PI0:_PI1], packed[:, _TF0:_TF1],
            packed[:, _PT0:_PT1])


@partial(jax.jit, static_argnums=(1,))
def _forward_image(params, n_pad, img_pad, n_arr):
    pix = MC_SIZE * MC_SIZE
    img_ops, img_specs = _img_operands(params, img_pad, n_arr, n_pad)
    feat, packed = pl.pallas_call(
        partial(_image_kernel, n_pad=n_pad, pix=pix),
        out_shape=(jax.ShapeDtypeStruct((n_pad, IMG_FEAT_CH), jnp.float32),
                   jax.ShapeDtypeStruct((1, PACK_W), jnp.float32)),
        in_specs=img_specs,
        out_specs=(_VMEM, _VMEM),
    )(*img_ops)
    return feat, packed[:, _PI0:_PI1]


@jax.jit
def _forward_text(params, text):
    txt_ops, txt_specs = _text_operands(params, text)
    packed = pl.pallas_call(
        _text_kernel,
        out_shape=jax.ShapeDtypeStruct((1, PACK_W), jnp.float32),
        in_specs=txt_specs,
        out_specs=_VMEM,
    )(*txt_ops)
    return packed[:, _TF0:_TF1], packed[:, _PT0:_PT1]


# ---------------------------------------------------------------------------
# Deterministic parameter initialization (shapes follow the module's __init__)
# ---------------------------------------------------------------------------
def init_params(key, max_valid_slice_num):
    k = jax.random.split(key, 8)
    s = 0.1
    return {
        # ResNetEncoder stand-in: conv [C_out, C_in, KH, KW]
        "conv_w": jax.random.normal(k[0], (IMG_FEAT_CH, 1, KH, KW), jnp.float32) * s,
        "conv_b": jax.random.normal(k[1], (IMG_FEAT_CH,), jnp.float32) * s,
        # TextEncoder stand-in: Linear(text_len -> TXT_FEAT_CH)
        "te_w": jax.random.normal(k[2], (MC_TEXT_LEN, TXT_FEAT_CH), jnp.float32) * s,
        "te_b": jax.random.normal(k[3], (TXT_FEAT_CH,), jnp.float32) * s,
        # fc_image: Linear(image_feature_channel, 1) + ReLU (stored as row vector)
        "fc_image_w": jax.random.normal(k[4], (1, IMG_FEAT_CH), jnp.float32) * s,
        "fc_image_b": jnp.zeros((1,), jnp.float32),
        # fc_text: Linear(text_feature_channel, 1) + ReLU
        "fc_text_w": jax.random.normal(k[5], (TXT_FEAT_CH, 1), jnp.float32) * s,
        "fc_text_b": jnp.zeros((1,), jnp.float32),
        # fc_survivals: Linear(max_valid_slice_num, survivals_len) + Sigmoid
        "fc_surv_w": jax.random.normal(
            k[6], (max_valid_slice_num, MC_SURVIVALS_LEN), jnp.float32) * s,
        "fc_surv_b": jax.random.normal(k[7], (MC_SURVIVALS_LEN,), jnp.float32) * s,
    }


# ---------------------------------------------------------------------------
# ChauhanModel.forward equivalent
# ---------------------------------------------------------------------------
def chauhan_forward(params, max_valid_slice_num, image3D=None, text=None):
    image_feature = None
    text_feature = None
    pred_img = None
    pred_txt = None

    has_image = image3D is not None
    has_text = text is not None

    if has_image:
        n, cin, H, W = image3D.shape
        assert cin == 1 and H == MC_SIZE and W == MC_SIZE
        assert n <= max_valid_slice_num, "more slices than max_valid_slice_num"
        # Zero-pad the slice axis OUTSIDE the jitted graph so the compiled
        # program shape is fixed: one compile serves every n <= max.
        img_pad = jnp.zeros((max_valid_slice_num, H, W), jnp.float32)
        img_pad = img_pad.at[:n].set(image3D[:, 0].astype(jnp.float32))
        n_arr = jnp.asarray([n], jnp.int32)          # dynamic valid-slice count

    if has_image and has_text:
        feat, pred_img, text_feature, pred_txt = _forward_fused(
            params, max_valid_slice_num, img_pad, n_arr, text)
        image_feature = feat[:n]
    elif has_image:
        feat, pred_img = _forward_image(params, max_valid_slice_num, img_pad, n_arr)
        image_feature = feat[:n]
    elif has_text:
        text_feature, pred_txt = _forward_text(params, text)

    return image_feature, text_feature, pred_img, pred_txt


# ---------------------------------------------------------------------------
if __name__ == "__main__":
    max_valid_slice_num = 8
    n_slices = 6                                  # valid slices for this patient

    key = jax.random.PRNGKey(0)
    kp, ki, kt = jax.random.split(key, 3)
    params = init_params(kp, max_valid_slice_num)

    image3D = jax.random.uniform(ki, (n_slices, 1, MC_SIZE, MC_SIZE), jnp.float32)
    text = jax.random.uniform(kt, (1, MC_TEXT_LEN), jnp.float32)

    # Fused (image + text) path.
    outs = jax.block_until_ready(
        chauhan_forward(params, max_valid_slice_num, image3D, text))
    image_feature, text_feature, pred_img, pred_txt = outs
    assert image_feature.shape == (n_slices, IMG_FEAT_CH)
    assert text_feature.shape == (1, TXT_FEAT_CH)
    assert pred_img.shape == (1, MC_SURVIVALS_LEN)
    assert pred_txt.shape == (1, 1)
    assert bool(jnp.all(jnp.isfinite(image_feature)))
    assert bool(jnp.all((pred_img >= 0.0) & (pred_img <= 1.0)))
    assert bool(jnp.all(pred_txt >= 0.0))

    # Different slice count reuses the SAME compiled program (dynamic n).
    outs2 = jax.block_until_ready(
        chauhan_forward(params, max_valid_slice_num, image3D[:3], text))
    assert outs2[0].shape == (3, IMG_FEAT_CH)
    assert bool(jnp.all((outs2[2] >= 0.0) & (outs2[2] <= 1.0)))

    # Image-only path.
    outs3 = jax.block_until_ready(
        chauhan_forward(params, max_valid_slice_num, image3D, None))
    assert outs3[1] is None and outs3[3] is None
    assert outs3[0].shape == (n_slices, IMG_FEAT_CH)

    # Text-only path.
    outs4 = jax.block_until_ready(
        chauhan_forward(params, max_valid_slice_num, None, text))
    assert outs4[0] is None and outs4[2] is None
    assert outs4[1].shape == (1, TXT_FEAT_CH)

    print("KERNEL_OK")
</pallas_src>

<mosaic_0001>
module attributes {stable_mosaic.version = 11 : i64} {
  func.func @_fused_kernel(%arg0: memref<1xi32, #tpu.memory_space<smem>>, %arg1: memref<9x2048xbf16, #tpu.memory_space<vmem>>, %arg2: memref<32x9xbf16, #tpu.memory_space<vmem>>, %arg3: memref<32x1xf32, #tpu.memory_space<vmem>>, %arg4: memref<1x32xf32, #tpu.memory_space<vmem>>, %arg5: memref<1x1xf32, #tpu.memory_space<vmem>>, %arg6: memref<8x4xf32, #tpu.memory_space<vmem>>, %arg7: memref<1x4xf32, #tpu.memory_space<vmem>>, %arg8: memref<1x32xf32, #tpu.memory_space<vmem>>, %arg9: memref<32x16xf32, #tpu.memory_space<vmem>>, %arg10: memref<1x16xf32, #tpu.memory_space<vmem>>, %arg11: memref<16x1xf32, #tpu.memory_space<vmem>>, %arg12: memref<1x1xf32, #tpu.memory_space<vmem>>, %arg13: memref<8x32xf32, #tpu.memory_space<vmem>>, %arg14: memref<1x128xf32, #tpu.memory_space<vmem>>) attributes {dimension_semantics = [], scalar_prefetch = 0 : i64, scratch_operands = 0 : i64, tpu.core_type = #tpu.core_type<tc>} {
    %c0 = arith.constant 0 : index
    %0 = memref.load %arg0[%c0] : memref<1xi32, #tpu.memory_space<smem>>
    %c0_0 = arith.constant 0 : index
    %c0_1 = arith.constant 0 : index
    %1 = vector.load %arg1[%c0_0, %c0_1] : memref<9x2048xbf16, #tpu.memory_space<vmem>>, vector<9x2048xbf16>
    %c0_2 = arith.constant 0 : index
    %c0_3 = arith.constant 0 : index
    %2 = vector.load %arg2[%c0_2, %c0_3] : memref<32x9xbf16, #tpu.memory_space<vmem>>, vector<32x9xbf16>
    %c0_4 = arith.constant 0 : index
    %c0_5 = arith.constant 0 : index
    %3 = vector.load %arg3[%c0_4, %c0_5] : memref<32x1xf32, #tpu.memory_space<vmem>>, vector<32x1xf32>
    %c0_6 = arith.constant 0 : index
    %c0_7 = arith.constant 0 : index
    %4 = vector.load %arg4[%c0_6, %c0_7] : memref<1x32xf32, #tpu.memory_space<vmem>>, vector<1x32xf32>
    %c0_8 = arith.constant 0 : index
    %c0_9 = arith.constant 0 : index
    %5 = vector.load %arg5[%c0_8, %c0_9] : memref<1x1xf32, #tpu.memory_space<vmem>>, vector<1x1xf32>
    %c0_10 = arith.constant 0 : index
    %c0_11 = arith.constant 0 : index
    %6 = vector.load %arg6[%c0_10, %c0_11] : memref<8x4xf32, #tpu.memory_space<vmem>>, vector<8x4xf32>
    %c0_12 = arith.constant 0 : index
    %c0_13 = arith.constant 0 : index
    %7 = vector.load %arg7[%c0_12, %c0_13] : memref<1x4xf32, #tpu.memory_space<vmem>>, vector<1x4xf32>
    %cst = arith.constant dense<0.000000e+00> : vector<32x2048xf32>
    %8 = tpu.matmul %2, %1, %cst {dimension_numbers = #tpu.dot_dimension_numbers<[1], [0], [0], [1], [0, 0, 1, 1], [], []>} : vector<32x9xbf16>, vector<9x2048xbf16>, vector<32x2048xf32> -> vector<32x2048xf32>
    %9 = vector.broadcast %3 : vector<32x1xf32> to vector<32x2048xf32>
    %10 = arith.addf %8, %9 : vector<32x2048xf32>
    %cst_14 = arith.constant 0.000000e+00 : f32
    %11 = vector.broadcast %cst_14 : f32 to vector<32x2048xf32>
    %12 = arith.maximumf %10, %11 : vector<32x2048xf32>
    %13 = vector.extract_strided_slice %12 {offsets = [0, 0], sizes = [32, 256], strides = [1, 1]} : vector<32x2048xf32> to vector<32x256xf32>
    %cst_15 = arith.constant dense<0.000000e+00> : vector<32xf32>
    %14 = vector.multi_reduction <add>, %13, %cst_15 [1] : vector<32x256xf32> to vector<32xf32>
    %15 = vector.shape_cast %14 : vector<32xf32> to vector<32x1xf32>
    %16 = vector.extract_strided_slice %12 {offsets = [0, 256], sizes = [32, 256], strides = [1, 1]} : vector<32x2048xf32> to vector<32x256xf32>
    %cst_16 = arith.constant dense<0.000000e+00> : vector<32xf32>
    %17 = vector.multi_reduction <add>, %16, %cst_16 [1] : vector<32x256xf32> to vector<32xf32>
    %18 = vector.shape_cast %17 : vector<32xf32> to vector<32x1xf32>
    %19 = vector.extract_strided_slice %12 {offsets = [0, 512], sizes = [32, 256], strides = [1, 1]} : vector<32x2048xf32> to vector<32x256xf32>
    %cst_17 = arith.constant dense<0.000000e+00> : vector<32xf32>
    %20 = vector.multi_reduction <add>, %19, %cst_17 [1] : vector<32x256xf32> to vector<32xf32>
    %21 = vector.shape_cast %20 : vector<32xf32> to vector<32x1xf32>
    %22 = vector.extract_strided_slice %12 {offsets = [0, 768], sizes = [32, 256], strides = [1, 1]} : vector<32x2048xf32> to vector<32x256xf32>
    %cst_18 = arith.constant dense<0.000000e+00> : vector<32xf32>
    %23 = vector.multi_reduction <add>, %22, %cst_18 [1] : vector<32x256xf32> to vector<32xf32>
    %24 = vector.shape_cast %23 : vector<32xf32> to vector<32x1xf32>
    %25 = vector.extract_strided_slice %12 {offsets = [0, 1024], sizes = [32, 256], strides = [1, 1]} : vector<32x2048xf32> to vector<32x256xf32>
    %cst_19 = arith.constant dense<0.000000e+00> : vector<32xf32>
    %26 = vector.multi_reduction <add>, %25, %cst_19 [1] : vector<32x256xf32> to vector<32xf32>
    %27 = vector.shape_cast %26 : vector<32xf32> to vector<32x1xf32>
    %28 = vector.extract_strided_slice %12 {offsets = [0, 1280], sizes = [32, 256], strides = [1, 1]} : vector<32x2048xf32> to vector<32x256xf32>
    %cst_20 = arith.constant dense<0.000000e+00> : vector<32xf32>
    %29 = vector.multi_reduction <add>, %28, %cst_20 [1] : vector<32x256xf32> to vector<32xf32>
    %30 = vector.shape_cast %29 : vector<32xf32> to vector<32x1xf32>
    %31 = vector.extract_strided_slice %12 {offsets = [0, 1536], sizes = [32, 256], strides = [1, 1]} : vector<32x2048xf32> to vector<32x256xf32>
    %cst_21 = arith.constant dense<0.000000e+00> : vector<32xf32>
    %32 = vector.multi_reduction <add>, %31, %cst_21 [1] : vector<32x256xf32> to vector<32xf32>
    %33 = vector.shape_cast %32 : vector<32xf32> to vector<32x1xf32>
    %34 = vector.extract_strided_slice %12 {offsets = [0, 1792], sizes = [32, 256], strides = [1, 1]} : vector<32x2048xf32> to vector<32x256xf32>
    %cst_22 = arith.constant dense<0.000000e+00> : vector<32xf32>
    %35 = vector.multi_reduction <add>, %34, %cst_22 [1] : vector<32x256xf32> to vector<32xf32>
    %36 = vector.shape_cast %35 : vector<32xf32> to vector<32x1xf32>
    %37 = tpu.concatenate %15, %18, %21, %24, %27, %30, %33, %36 in 1 : vector<32x1xf32>, vector<32x1xf32>, vector<32x1xf32>, vector<32x1xf32>, vector<32x1xf32>, vector<32x1xf32>, vector<32x1xf32>, vector<32x1xf32> -> vector<32x8xf32>
    %cst_23 = arith.constant 3.906250e-03 : f32
    %38 = vector.broadcast %cst_23 : f32 to vector<32x8xf32>
    %39 = arith.mulf %37, %38 : vector<32x8xf32>
    %cst_24 = arith.constant dense<0.000000e+00> : vector<1x8xf32>
    %40 = tpu.matmul %4, %39, %cst_24 {dimension_numbers = #tpu.dot_dimension_numbers<[1], [0], [0], [1], [0, 0, 1, 1], [], []>} : vector<1x32xf32>, vector<32x8xf32>, vector<1x8xf32> -> vector<1x8xf32>
    %41 = vector.broadcast %5 : vector<1x1xf32> to vector<1x8xf32>
    %42 = arith.addf %40, %41 : vector<1x8xf32>
    %cst_25 = arith.constant 0.000000e+00 : f32
    %43 = vector.broadcast %cst_25 : f32 to vector<1x8xf32>
    %44 = arith.maximumf %42, %43 : vector<1x8xf32>
    %45 = tpu.iota {dimensions = array<i32: 1>} : vector<1x8xi32>
    %46 = vector.broadcast %0 : i32 to vector<1x8xi32>
    %47 = arith.cmpi slt, %45, %46 : vector<1x8xi32>
    %cst_26 = arith.constant 0.000000e+00 : f32
    %48 = vector.broadcast %cst_26 : f32 to vector<1x8xf32>
    %49 = arith.select %47, %44, %48 : vector<1x8xi1>, vector<1x8xf32>
    %cst_27 = arith.constant dense<0.000000e+00> : vector<1x4xf32>
    %50 = tpu.matmul %49, %6, %cst_27 {dimension_numbers = #tpu.dot_dimension_numbers<[1], [0], [0], [1], [0, 0, 1, 1], [], []>} : vector<1x8xf32>, vector<8x4xf32>, vector<1x4xf32> -> vector<1x4xf32>
    %51 = arith.addf %50, %7 : vector<1x4xf32>
    %cst_28 = arith.constant 0.000000e+00 : f32
    %52 = vector.broadcast %cst_28 : f32 to vector<1x4xf32>
    %53 = arith.subf %52, %51 : vector<1x4xf32>
    %54 = math.exp %53 : vector<1x4xf32>
    %cst_29 = arith.constant 1.000000e+00 : f32
    %55 = vector.broadcast %cst_29 : f32 to vector<1x4xf32>
    %56 = arith.addf %55, %54 : vector<1x4xf32>
    %cst_30 = arith.constant 1.000000e+00 : f32
    %57 = vector.broadcast %cst_30 : f32 to vector<1x4xf32>
    %58 = arith.divf %57, %56 : vector<1x4xf32>
    %59 = tpu.transpose %39, [1, 0] : vector<32x8xf32> -> vector<8x32xf32>
    %c0_31 = arith.constant 0 : index
    %c0_32 = arith.constant 0 : index
    %60 = vector.load %arg8[%c0_31, %c0_32] : memref<1x32xf32, #tpu.memory_space<vmem>>, vector<1x32xf32>
    %c0_33 = arith.constant 0 : index
    %c0_34 = arith.constant 0 : index
    %61 = vector.load %arg9[%c0_33, %c0_34] : memref<32x16xf32, #tpu.memory_space<vmem>>, vector<32x16xf32>
    %c0_35 = arith.constant 0 : index
    %c0_36 = arith.constant 0 : index
    %62 = vector.load %arg10[%c0_35, %c0_36] : memref<1x16xf32, #tpu.memory_space<vmem>>, vector<1x16xf32>
    %c0_37 = arith.constant 0 : index
    %c0_38 = arith.constant 0 : index
    %63 = vector.load %arg11[%c0_37, %c0_38] : memref<16x1xf32, #tpu.memory_space<vmem>>, vector<16x1xf32>
    %c0_39 = arith.constant 0 : index
    %c0_40 = arith.constant 0 : index
    %64 = vector.load %arg12[%c0_39, %c0_40] : memref<1x1xf32, #tpu.memory_space<vmem>>, vector<1x1xf32>
    %cst_41 = arith.constant dense<0.000000e+00> : vector<1x16xf32>
    %65 = tpu.matmul %60, %61, %cst_41 {dimension_numbers = #tpu.dot_dimension_numbers<[1], [0], [0], [1], [0, 0, 1, 1], [], []>} : vector<1x32xf32>, vector<32x16xf32>, vector<1x16xf32> -> vector<1x16xf32>
    %66 = arith.addf %65, %62 : vector<1x16xf32>
    %cst_42 = arith.constant 0.000000e+00 : f32
    %67 = vector.broadcast %cst_42 : f32 to vector<1x16xf32>
    %68 = arith.maximumf %66, %67 : vector<1x16xf32>
    %cst_43 = arith.constant dense<0.000000e+00> : vector<1x1xf32>
    %69 = tpu.matmul %68, %63, %cst_43 {dimension_numbers = #tpu.dot_dimension_numbers<[1], [0], [0], [1], [0, 0, 1, 1], [], []>} : vector<1x16xf32>, vector<16x1xf32>, vector<1x1xf32> -> vector<1x1xf32>
    %70 = arith.addf %69, %64 : vector<1x1xf32>
    %cst_44 = arith.constant 0.000000e+00 : f32
    %71 = vector.broadcast %cst_44 : f32 to vector<1x1xf32>
    %72 = arith.maximumf %70, %71 : vector<1x1xf32>
    %c0_45 = arith.constant 0 : index
    %c0_46 = arith.constant 0 : index
    %73 = vector.load %arg13[%c0_45, %c0_46] : memref<8x32xf32, #tpu.memory_space<vmem>>, vector<8x32xf32>
    tpu.vector_store %arg13[%c0_45, %c0_46], %59 {strides = array<i32>} : memref<8x32xf32, #tpu.memory_space<vmem>>, vector<8x32xf32>,
    %cst_47 = arith.constant 0.000000e+00 : f32
    %74 = vector.broadcast %cst_47 : f32 to vector<1x107xf32>
    %75 = tpu.concatenate %58, %68, %72, %74 in 1 : vector<1x4xf32>, vector<1x16xf32>, vector<1x1xf32>, vector<1x107xf32> -> vector<1x128xf32>
    %c0_48 = arith.constant 0 : index
    %c0_49 = arith.constant 0 : index
    %76 = vector.load %arg14[%c0_48, %c0_49] : memref<1x128xf32, #tpu.memory_space<vmem>>, vector<1x128xf32>
    tpu.vector_store %arg14[%c0_48, %c0_49], %75 {strides = array<i32>} : memref<1x128xf32, #tpu.memory_space<vmem>>, vector<1x128xf32>,
    return
  }
}

</mosaic_0001>

<llo_original>
// kernel: _forward_fused.1
$region0: #{_forward_fused.1}
  #allocation0 [shape = 'u32[]', space=smem, size = 0x4, offset = 0x4, fixed_abs, tag = 'smem constant byte address 0x4 - core index']
  #allocation1 [shape = 'u32[144,128]{1,0:T(1,128)}', space=vmem, size = 0x12000, scoped, tag = 'internal scratch']
  #allocation2 [shape = 's32[1]{0:T(128)S(6)}', space=smem, size = 0x200, scoped, tag = 'scoped memory for _forward_fused.1']
  #allocation3 [shape = 'f32[1,1]{1,0:T(1,128)S(1)}', space=vmem, size = 0x200, scoped, tag = 'scoped memory for _forward_fused.1']
  #allocation4 [shape = 'f32[1,1]{1,0:T(1,128)S(1)}', space=vmem, size = 0x200, scoped, tag = 'scoped memory for _forward_fused.1']
  %s0 = inlined_call_operand.<no memory space> [shape: s32[1], index: 0, kind: input, shape index: {}]
  %s1 = inlined_call_operand.vmem [shape: bf16[9,2048], index: 1, kind: input, shape index: {}]
  %s2 = inlined_call_operand.vmem [shape: bf16[32,9], index: 2, kind: input, shape index: {}]
  %s3 = inlined_call_operand.vmem [shape: f32[32,1], index: 3, kind: input, shape index: {}]
  %s4 = inlined_call_operand.vmem [shape: f32[1,32], index: 4, kind: input, shape index: {}]
  %s5 = inlined_call_operand.<no memory space> [shape: f32[1,1], index: 5, kind: input, shape index: {}]
  %s6 = inlined_call_operand.vmem [shape: f32[8,4], index: 6, kind: input, shape index: {}]
  %s7 = inlined_call_operand.vmem [shape: f32[1,4], index: 7, kind: input, shape index: {}]
  %s8 = inlined_call_operand.vmem [shape: f32[1,32], index: 8, kind: input, shape index: {}]
  %s9 = inlined_call_operand.vmem [shape: f32[32,16], index: 9, kind: input, shape index: {}]
  %s10 = inlined_call_operand.vmem [shape: f32[1,16], index: 10, kind: input, shape index: {}]
  %s11 = inlined_call_operand.vmem [shape: f32[16,1], index: 11, kind: input, shape index: {}]
  %s12 = inlined_call_operand.<no memory space> [shape: f32[1,1], index: 12, kind: input, shape index: {}]
  %s13 = inlined_call_operand.hbm [shape: f32[8,32], index: 13, kind: output, shape index: {0}]
  %s14 = inlined_call_operand.vmem [shape: f32[1,128], index: 14, kind: output, shape index: {1}]
  %15 = xla_tuple %s13, %s14
  %s16 = sld [smem:[#allocation0]]
  $region70: #{_forward_fused.1} parent=0
    _
  %s18 = ssub.s32 1, %s16
  %s19 = scalar_select 0, %s18, %s16
  %20 = sst [smem:[#allocation2]] %s0
  %v21 = vstv %s5
  %22 = vst [vmem:[#allocation3] sm:$0x1] %v21
  %v23 = vstv %s12
  %24 = vst [vmem:[#allocation4] sm:$0x1] %v23
  $region1: #{_forward_fused.1} parent=0
    #allocation5 [shape = 'u8[4096]{0}', space=vmem, size = 0x1000, scoped, tag = 'output window, operand 0, single buffered']
    #allocation6 [shape = 's32[1]{0}', space=sflag, size = 0x4, scoped, tag = 'scoped memory for _forward_fused.1']
    %25 = vsyncpa [#allocation6], 0
    // Predicated region
    $region2: #{_forward_fused.1} parent=1 // pred_check
      _
    $region3: #{_forward_fused.1} parent=1 // pred_check_branch
      %27 = sbr.rel (0) target = $region5
    $region4: #{_forward_fused.1} parent=1 // pred_region
      _
    $region5: #{_forward_fused.1} parent=1 // pred_fallthru
      _
    // Predicated region
    $region6: #{_forward_fused.1} parent=1 // pred_check
      _
    $region7: #{_forward_fused.1} parent=1 // pred_check_branch
      %29 = sbr.rel (0) target = $region9
    $region8: #{_forward_fused.1} parent=1 // pred_region
      _
    $region9: #{_forward_fused.1} parent=1 // pred_fallthru
      _
    // Predicated region
    $region10: #{_forward_fused.1} parent=1 // pred_check
      _
    $region11: #{_forward_fused.1} parent=1 // pred_check_branch
      %31 = sbr.rel (0) target = $region13
    $region12: #{_forward_fused.1} parent=1 // pred_region
      _
    $region13: #{_forward_fused.1} parent=1 // pred_fallthru
      _
    // Predicated region
    $region14: #{_forward_fused.1} parent=1 // pred_check
      _
    $region15: #{_forward_fused.1} parent=1 // pred_check_branch
      %33 = sbr.rel (0) target = $region17
    $region16: #{_forward_fused.1} parent=1 // pred_region
      _
    $region17: #{_forward_fused.1} parent=1 // pred_fallthru
      _
    // Predicated region
    $region18: #{_forward_fused.1} parent=1 // pred_check
      _
    $region19: #{_forward_fused.1} parent=1 // pred_check_branch
      %35 = sbr.rel (0) target = $region21
    $region20: #{_forward_fused.1} parent=1 // pred_region
      _
    $region21: #{_forward_fused.1} parent=1 // pred_fallthru
      _
    // Predicated region
    $region22: #{_forward_fused.1} parent=1 // pred_check
      _
    $region23: #{_forward_fused.1} parent=1 // pred_check_branch
      %37 = sbr.rel (0) target = $region25
    $region24: #{_forward_fused.1} parent=1 // pred_region
      _
    $region25: #{_forward_fused.1} parent=1 // pred_fallthru
      _
    // Predicated region
    $region26: #{_forward_fused.1} parent=1 // pred_check
      _
    $region27: #{_forward_fused.1} parent=1 // pred_check_branch
      %39 = sbr.rel (0) target = $region29
    $region28: #{_forward_fused.1} parent=1 // pred_region
      _
    $region29: #{_forward_fused.1} parent=1 // pred_fallthru
      _
    // Predicated region
    $region30: #{_forward_fused.1} parent=1 // pred_check
      _
    $region31: #{_forward_fused.1} parent=1 // pred_check_branch
      %41 = sbr.rel (0) target = $region33
    $region32: #{_forward_fused.1} parent=1 // pred_region
      _
    $region33: #{_forward_fused.1} parent=1 // pred_fallthru
      _
    // Predicated region
    $region34: #{_forward_fused.1} parent=1 // pred_check
      _
    $region35: #{_forward_fused.1} parent=1 // pred_check_branch
      %43 = sbr.rel (0) target = $region37
    $region36: #{_forward_fused.1} parent=1 // pred_region
      _
    $region37: #{_forward_fused.1} parent=1 // pred_fallthru
      _
    // Predicated region
    $region38: #{_forward_fused.1} parent=1 // pred_check
      _
    $region39: #{_forward_fused.1} parent=1 // pred_check_branch
      %45 = sbr.rel (0) target = $region41
    $region40: #{_forward_fused.1} parent=1 // pred_region
      _
    $region41: #{_forward_fused.1} parent=1 // pred_fallthru
      _
    // Predicated region
    $region42: #{_forward_fused.1} parent=1 // pred_check
      _
    $region43: #{_forward_fused.1} parent=1 // pred_check_branch
      %47 = sbr.rel (0) target = $region45
    $region44: #{_forward_fused.1} parent=1 // pred_region
      _
    $region45: #{_forward_fused.1} parent=1 // pred_fallthru
      _
    // Predicated region
    $region46: #{_forward_fused.1} parent=1 // pred_check
      _
    $region47: #{_forward_fused.1} parent=1 // pred_check_branch
      %49 = sbr.rel (0) target = $region49
    $region48: #{_forward_fused.1} parent=1 // pred_region
      _
    $region49: #{_forward_fused.1} parent=1 // pred_fallthru
      _
    // Predicated region
    $region50: #{_forward_fused.1} parent=1 // pred_check
      _
    $region51: #{_forward_fused.1} parent=1 // pred_check_branch
      %51 = sbr.rel (0) target = $region53
    $region52: #{_forward_fused.1} parent=1 // pred_region
      _
    $region53: #{_forward_fused.1} parent=1 // pred_fallthru
      _
    %s53 = sld [smem:[#allocation2]]
    %v54 = vld [vmem:[%s1] sm:$0xff]
    %v55 = vld [vmem:[%s1 + $0x8] sm:$0xff]
    %v56 = vld [vmem:[%s1 + $0x10] sm:$0xff]
    %v57 = vld [vmem:[%s1 + $0x18] sm:$0xff]
    %v58 = vld [vmem:[%s1 + $0x20] sm:$0xff]
    %v59 = vld [vmem:[%s1 + $0x28] sm:$0xff]
    %v60 = vld [vmem:[%s1 + $0x30] sm:$0xff]
    %v61 = vld [vmem:[%s1 + $0x38] sm:$0xff]
    %v62 = vld [vmem:[%s1 + $0x40] sm:$0x11]
    %v63 = vld [vmem:[%s1 + $0x48] sm:$0x11]
    %v64 = vld [vmem:[%s1 + $0x50] sm:$0x11]
    %v65 = vld [vmem:[%s1 + $0x58] sm:$0x11]
    %v66 = vld [vmem:[%s1 + $0x60] sm:$0x11]
    %v67 = vld [vmem:[%s1 + $0x68] sm:$0x11]
    %v68 = vld [vmem:[%s1 + $0x70] sm:$0x11]
    %v69 = vld [vmem:[%s1 + $0x78] sm:$0x11]
    %v70 = vld [vmem:[%s2] sm:$0xf]
    %v71 = vld [vmem:[%s2 + $0x4] sm:$0xf]
    %v72 = vld [vmem:[%s2 + $0x8] sm:$0xf]
    %v73 = vld [vmem:[%s2 + $0xc] sm:$0xf]
    %v74 = vld [vmem:[%s3] sm:$0xff]
    %v75 = vld [vmem:[%s3 + $0x8] sm:$0xff]
    %v76 = vld [vmem:[%s3 + $0x10] sm:$0xff]
    %v77 = vld [vmem:[%s3 + $0x18] sm:$0xff]
    %v78 = vld [vmem:[%s4] sm:$0x1]
    %v79 = vld [vmem:[#allocation3] sm:$0x1]
    %v80 = vld [vmem:[%s6] sm:$0xff]
    %v81 = vld [vmem:[%s7] sm:$0x1]
    %83 = vset.pattern.permute.xlu0 0
    %84 = vperm.xlu0 %83, %v74
    %v85 = vpop.permute.xlu0 %84
    %88 = vset.pattern.permute.xlu0 0
    %89 = vperm.xlu0 %88, %v75
    %v90 = vpop.permute.xlu0 %89
    %93 = vset.pattern.permute.xlu0 0
    %94 = vperm.xlu0 %93, %v76
    %v95 = vpop.permute.xlu0 %94
    %98 = vset.pattern.permute.xlu0 0
    %99 = vperm.xlu0 %98, %v77
    %v100 = vpop.permute.xlu0 %99
    %v106 = vunpack.c.l.b16 %v70
    %v107 = vunpack.c.l.b16 %v71
    %v108 = vunpack.c.l.b16 %v72
    %v109 = vunpack.c.l.b16 %v73
    %v110 = vpack.c.b16 %v107, %v106
    %v111 = vpack.c.b16 %v109, %v108
    %v128 = vunpack.c.l.b16 %v54
    %v129 = vunpack.c.h.b16 %v54
    %v130 = vunpack.c.l.b16 %v55
    %v131 = vunpack.c.h.b16 %v55
    %v132 = vunpack.c.l.b16 %v56
    %v133 = vunpack.c.h.b16 %v56
    %v134 = vunpack.c.l.b16 %v57
    %v135 = vunpack.c.h.b16 %v57
    %v136 = vunpack.c.l.b16 %v58
    %v137 = vunpack.c.h.b16 %v58
    %v138 = vunpack.c.l.b16 %v59
    %v139 = vunpack.c.h.b16 %v59
    %v140 = vunpack.c.l.b16 %v60
    %v141 = vunpack.c.h.b16 %v60
    %v142 = vunpack.c.l.b16 %v61
    %v143 = vunpack.c.h.b16 %v61
    %v144 = vunpack.c.l.b16 %v62
    %v145 = vunpack.c.h.b16 %v62
    %v146 = vunpack.c.l.b16 %v63
    %v147 = vunpack.c.h.b16 %v63
    %v148 = vunpack.c.l.b16 %v64
    %v149 = vunpack.c.h.b16 %v64
    %v150 = vunpack.c.l.b16 %v65
    %v151 = vunpack.c.h.b16 %v65
    %v152 = vunpack.c.l.b16 %v66
    %v153 = vunpack.c.h.b16 %v66
    %v154 = vunpack.c.l.b16 %v67
    %v155 = vunpack.c.h.b16 %v67
    %v156 = vunpack.c.l.b16 %v68
    %v157 = vunpack.c.h.b16 %v68
    %v158 = vunpack.c.l.b16 %v69
    %v159 = vunpack.c.h.b16 %v69
    %v160 = vpack.c.b16 %v144, %v128
    %v161 = vpack.c.b16 %v145, %v129
    %v162 = vpack.c.b16 %v146, %v130
    %v163 = vpack.c.b16 %v147, %v131
    %v164 = vpack.c.b16 %v148, %v132
    %v165 = vpack.c.b16 %v149, %v133
    %v166 = vpack.c.b16 %v150, %v134
    %v167 = vpack.c.b16 %v151, %v135
    %v168 = vpack.c.b16 %v152, %v136
    %v169 = vpack.c.b16 %v153, %v137
    %v170 = vpack.c.b16 %v154, %v138
    %v171 = vpack.c.b16 %v155, %v139
    %v172 = vpack.c.b16 %v156, %v140
    %v173 = vpack.c.b16 %v157, %v141
    %v174 = vpack.c.b16 %v158, %v142
    %v175 = vpack.c.b16 %v159, %v143
    %vm176 = vcmask 72704
    %v178 = vsel %vm176, %v110, 0
    %v181 = vsel %vm176, %v111, 0
    %vm183 = vcmask 1043456
    %vm184 = vcmask 1044480
    %v185 = vsel %vm183, 4294967295, 65535
    %v186 = vsel %vm184, %v185, 0
    %v188 = vand.u32 %v160, %v186
    %v191 = vand.u32 %v161, %v186
    %v194 = vand.u32 %v162, %v186
    %v197 = vand.u32 %v163, %v186
    %v200 = vand.u32 %v164, %v186
    %v203 = vand.u32 %v165, %v186
    %v206 = vand.u32 %v166, %v186
    %v209 = vand.u32 %v167, %v186
    %v212 = vand.u32 %v168, %v186
    %v215 = vand.u32 %v169, %v186
    %v218 = vand.u32 %v170, %v186
    %v221 = vand.u32 %v171, %v186
    %v224 = vand.u32 %v172, %v186
    %v227 = vand.u32 %v173, %v186
    %v230 = vand.u32 %v174, %v186
    %v233 = vand.u32 %v175, %v186
    %235 = vmatprep.subr.bf16.mxu0 0
    %236 = vmatpush1.bf16.msra.mxu0 0
    %237 = vmatprep.subr.bf16.mxu0 0
    %238 = vmatpush1.bf16.msra.mxu0 0
    %239 = vmatprep.subr.bf16.mxu0 0
    %240 = vmatpush1.bf16.msra.mxu0 0
    %241 = vmatprep.subr.bf16.mxu0 0
    %242 = vmatpush1.bf16.msra.mxu0 0
    %243 = vmatprep.subr.bf16.mxu0 0
    %244 = vmatpush1.bf16.msra.mxu0 0
    %245 = vmatprep.subr.bf16.mxu0 0
    %246 = vmatpush1.bf16.msra.mxu0 0
    %247 = vmatprep.subr.bf16.mxu0 0
    %248 = vmatpush1.bf16.msra.mxu0 0
    %249 = vmatprep.subr.bf16.mxu0 %v191
    %250 = vmatpush1.bf16.msra.mxu0 %v188
    %251 = vmatprep.subr.bf16.mxu0 0
    %252 = vmatpush2.bf16.msra.mxu0 0
    %253 = vmatprep.subr.bf16.mxu0 0
    %254 = vmatpush2.bf16.msra.mxu0 0
    %255 = vmatprep.subr.bf16.mxu0 0
    %256 = vmatpush2.bf16.msra.mxu0 0
    %257 = vmatprep.subr.bf16.mxu0 0
    %258 = vmatpush2.bf16.msra.mxu0 0
    %259 = vmatprep.subr.bf16.mxu0 0
    %260 = vmatpush2.bf16.msra.mxu0 0
    %261 = vmatprep.subr.bf16.mxu0 0
    %262 = vmatpush2.bf16.msra.mxu0 0
    %263 = vmatprep.subr.bf16.mxu0 0
    %264 = vmatpush2.bf16.msra.mxu0 0
    %265 = vmatprep.subr.bf16.mxu0 0
    %266 = vmatpush2.bf16.msra.mxu0 0
    %267 = vmatprep.mubr.bf16.mxu0 0
    %268 = vmatmul.mubr.bf16.gmra.mxu0 %v178
    %v269 = vpop.f32.mrf.mxu0
    %v270 = vadd.f32 %v85, %v269
    %v271 = vpop.f32.mrf.mxu0
    %v272 = vadd.f32 %v85, %v271
    %v273 = vpop.f32.mrf.mxu0
    %v274 = vadd.f32 %v90, %v273
    %v275 = vpop.f32.mrf.mxu0
    %v276 = vadd.f32 %v90, %v275
    %277 = vmatprep.mubr.bf16.mxu0 0
    %278 = vmatmul.mubr.bf16.gmra.mxu0 %v181
    %v279 = vpop.f32.mrf.mxu0
    %v280 = vadd.f32 %v95, %v279
    %v281 = vpop.f32.mrf.mxu0
    %v282 = vadd.f32 %v95, %v281
    %v283 = vpop.f32.mrf.mxu0
    %v284 = vadd.f32 %v100, %v283
    %v285 = vpop.f32.mrf.mxu0
    %v286 = vadd.f32 %v100, %v285
    %287 = vdwg.mxu0
    %288 = vmatprep.subr.bf16.mxu0 0
    %289 = vmatpush1.bf16.msra.mxu0 0
    %290 = vmatprep.subr.bf16.mxu0 0
    %291 = vmatpush1.bf16.msra.mxu0 0
    %292 = vmatprep.subr.bf16.mxu0 0
    %293 = vmatpush1.bf16.msra.mxu0 0
    %294 = vmatprep.subr.bf16.mxu0 0
    %295 = vmatpush1.bf16.msra.mxu0 0
    %296 = vmatprep.subr.bf16.mxu0 0
    %297 = vmatpush1.bf16.msra.mxu0 0
    %298 = vmatprep.subr.bf16.mxu0 0
    %299 = vmatpush1.bf16.msra.mxu0 0
    %300 = vmatprep.subr.bf16.mxu0 0
    %301 = vmatpush1.bf16.msra.mxu0 0
    %302 = vmatprep.subr.bf16.mxu0 %v197
    %303 = vmatpush1.bf16.msra.mxu0 %v194
    %304 = vmatprep.subr.bf16.mxu0 0
    %305 = vmatpush2.bf16.msra.mxu0 0
    %306 = vmatprep.subr.bf16.mxu0 0
    %307 = vmatpush2.bf16.msra.mxu0 0
    %308 = vmatprep.subr.bf16.mxu0 0
    %309 = vmatpush2.bf16.msra.mxu0 0
    %310 = vmatprep.subr.bf16.mxu0 0
    %311 = vmatpush2.bf16.msra.mxu0 0
    %312 = vmatprep.subr.bf16.mxu0 0
    %313 = vmatpush2.bf16.msra.mxu0 0
    %314 = vmatprep.subr.bf16.mxu0 0
    %315 = vmatpush2.bf16.msra.mxu0 0
    %316 = vmatprep.subr.bf16.mxu0 0
    %317 = vmatpush2.bf16.msra.mxu0 0
    %318 = vmatprep.subr.bf16.mxu0 0
    %319 = vmatpush2.bf16.msra.mxu0 0
    %320 = vmatprep.mubr.bf16.mxu0 0
    %321 = vmatmul.mubr.bf16.gmra.mxu0 %v178
    %v322 = vpop.f32.mrf.mxu0
    %v323 = vadd.f32 %v85, %v322
    %v324 = vpop.f32.mrf.mxu0
    %v325 = vadd.f32 %v85, %v324
    %v326 = vpop.f32.mrf.mxu0
    %v327 = vadd.f32 %v90, %v326
    %v328 = vpop.f32.mrf.mxu0
    %v329 = vadd.f32 %v90, %v328
    %330 = vmatprep.mubr.bf16.mxu0 0
    %331 = vmatmul.mubr.bf16.gmra.mxu0 %v181
    %v332 = vpop.f32.mrf.mxu0
    %v333 = vadd.f32 %v95, %v332
    %v334 = vpop.f32.mrf.mxu0
    %v335 = vadd.f32 %v95, %v334
    %v336 = vpop.f32.mrf.mxu0
    %v337 = vadd.f32 %v100, %v336
    %v338 = vpop.f32.mrf.mxu0
    %v339 = vadd.f32 %v100, %v338
    %340 = vdwg.mxu0
    %341 = vmatprep.subr.bf16.mxu0 0
    %342 = vmatpush1.bf16.msra.mxu0 0
    %343 = vmatprep.subr.bf16.mxu0 0
    %344 = vmatpush1.bf16.msra.mxu0 0
    %345 = vmatprep.subr.bf16.mxu0 0
    %346 = vmatpush1.bf16.msra.mxu0 0
    %347 = vmatprep.subr.bf16.mxu0 0
    %348 = vmatpush1.bf16.msra.mxu0 0
    %349 = vmatprep.subr.bf16.mxu0 0
    %350 = vmatpush1.bf16.msra.mxu0 0
    %351 = vmatprep.subr.bf16.mxu0 0
    %352 = vmatpush1.bf16.msra.mxu0 0
    %353 = vmatprep.subr.bf16.mxu0 0
    %354 = vmatpush1.bf16.msra.mxu0 0
    %355 = vmatprep.subr.bf16.mxu0 %v203
    %356 = vmatpush1.bf16.msra.mxu0 %v200
    %357 = vmatprep.subr.bf16.mxu0 0
    %358 = vmatpush2.bf16.msra.mxu0 0
    %359 = vmatprep.subr.bf16.mxu0 0
    %360 = vmatpush2.bf16.msra.mxu0 0
    %361 = vmatprep.subr.bf16.mxu0 0
    %362 = vmatpush2.bf16.msra.mxu0 0
    %363 = vmatprep.subr.bf16.mxu0 0
    %364 = vmatpush2.bf16.msra.mxu0 0
    %365 = vmatprep.subr.bf16.mxu0 0
    %366 = vmatpush2.bf16.msra.mxu0 0
    %367 = vmatprep.subr.bf16.mxu0 0
    %368 = vmatpush2.bf16.msra.mxu0 0
    %369 = vmatprep.subr.bf16.mxu0 0
    %370 = vmatpush2.bf16.msra.mxu0 0
    %371 = vmatprep.subr.bf16.mxu0 0
    %372 = vmatpush2.bf16.msra.mxu0 0
    %373 = vmatprep.mubr.bf16.mxu0 0
    %374 = vmatmul.mubr.bf16.gmra.mxu0 %v178
    %v375 = vpop.f32.mrf.mxu0
    %v376 = vadd.f32 %v85, %v375
    %v377 = vpop.f32.mrf.mxu0
    %v378 = vadd.f32 %v85, %v377
    %v379 = vpop.f32.mrf.mxu0
    %v380 = vadd.f32 %v90, %v379
    %v381 = vpop.f32.mrf.mxu0
    %v382 = vadd.f32 %v90, %v381
    %383 = vmatprep.mubr.bf16.mxu0 0
    %384 = vmatmul.mubr.bf16.gmra.mxu0 %v181
    %v385 = vpop.f32.mrf.mxu0
    %v386 = vadd.f32 %v95, %v385
    %v387 = vpop.f32.mrf.mxu0
    %v388 = vadd.f32 %v95, %v387
    %v389 = vpop.f32.mrf.mxu0
    %v390 = vadd.f32 %v100, %v389
    %v391 = vpop.f32.mrf.mxu0
    %v392 = vadd.f32 %v100, %v391
    %393 = vdwg.mxu0
    %394 = vmatprep.subr.bf16.mxu0 0
    %395 = vmatpush1.bf16.msra.mxu0 0
    %396 = vmatprep.subr.bf16.mxu0 0
    %397 = vmatpush1.bf16.msra.mxu0 0
    %398 = vmatprep.subr.bf16.mxu0 0
    %399 = vmatpush1.bf16.msra.mxu0 0
    %400 = vmatprep.subr.bf16.mxu0 0
    %401 = vmatpush1.bf16.msra.mxu0 0
    %402 = vmatprep.subr.bf16.mxu0 0
    %403 = vmatpush1.bf16.msra.mxu0 0
    %404 = vmatprep.subr.bf16.mxu0 0
    %405 = vmatpush1.bf16.msra.mxu0 0
    %406 = vmatprep.subr.bf16.mxu0 0
    %407 = vmatpush1.bf16.msra.mxu0 0
    %408 = vmatprep.subr.bf16.mxu0 %v209
    %409 = vmatpush1.bf16.msra.mxu0 %v206
    %410 = vmatprep.subr.bf16.mxu0 0
    %411 = vmatpush2.bf16.msra.mxu0 0
    %412 = vmatprep.subr.bf16.mxu0 0
    %413 = vmatpush2.bf16.msra.mxu0 0
    %414 = vmatprep.subr.bf16.mxu0 0
    %415 = vmatpush2.bf16.msra.mxu0 0
    %416 = vmatprep.subr.bf16.mxu0 0
    %417 = vmatpush2.bf16.msra.mxu0 0
    %418 = vmatprep.subr.bf16.mxu0 0
    %419 = vmatpush2.bf16.msra.mxu0 0
    %420 = vmatprep.subr.bf16.mxu0 0
    %421 = vmatpush2.bf16.msra.mxu0 0
    %422 = vmatprep.subr.bf16.mxu0 0
    %423 = vmatpush2.bf16.msra.mxu0 0
    %424 = vmatprep.subr.bf16.mxu0 0
    %425 = vmatpush2.bf16.msra.mxu0 0
    %426 = vmatprep.mubr.bf16.mxu0 0
    %427 = vmatmul.mubr.bf16.gmra.mxu0 %v178
    %v428 = vpop.f32.mrf.mxu0
    %v429 = vadd.f32 %v85, %v428
    %v430 = vpop.f32.mrf.mxu0
    %v431 = vadd.f32 %v85, %v430
    %v432 = vpop.f32.mrf.mxu0
    %v433 = vadd.f32 %v90, %v432
    %v434 = vpop.f32.mrf.mxu0
    %v435 = vadd.f32 %v90, %v434
    %436 = vmatprep.mubr.bf16.mxu0 0
    %437 = vmatmul.mubr.bf16.gmra.mxu0 %v181
    %v438 = vpop.f32.mrf.mxu0
    %v439 = vadd.f32 %v95, %v438
    %v440 = vpop.f32.mrf.mxu0
    %v441 = vadd.f32 %v95, %v440
    %v442 = vpop.f32.mrf.mxu0
    %v443 = vadd.f32 %v100, %v442
    %v444 = vpop.f32.mrf.mxu0
    %v445 = vadd.f32 %v100, %v444
    %446 = vdwg.mxu0
    %447 = vmatprep.subr.bf16.mxu0 0
    %448 = vmatpush1.bf16.msra.mxu0 0
    %449 = vmatprep.subr.bf16.mxu0 0
    %450 = vmatpush1.bf16.msra.mxu0 0
    %451 = vmatprep.subr.bf16.mxu0 0
    %452 = vmatpush1.bf16.msra.mxu0 0
    %453 = vmatprep.subr.bf16.mxu0 0
    %454 = vmatpush1.bf16.msra.mxu0 0
    %455 = vmatprep.subr.bf16.mxu0 0
    %456 = vmatpush1.bf16.msra.mxu0 0
    %457 = vmatprep.subr.bf16.mxu0 0
    %458 = vmatpush1.bf16.msra.mxu0 0
    %459 = vmatprep.subr.bf16.mxu0 0
    %460 = vmatpush1.bf16.msra.mxu0 0
    %461 = vmatprep.subr.bf16.mxu0 %v215
    %462 = vmatpush1.bf16.msra.mxu0 %v212
    %463 = vmatprep.subr.bf16.mxu0 0
    %464 = vmatpush2.bf16.msra.mxu0 0
    %465 = vmatprep.subr.bf16.mxu0 0
    %466 = vmatpush2.bf16.msra.mxu0 0
    %467 = vmatprep.subr.bf16.mxu0 0
    %468 = vmatpush2.bf16.msra.mxu0 0
    %469 = vmatprep.subr.bf16.mxu0 0
    %470 = vmatpush2.bf16.msra.mxu0 0
    %471 = vmatprep.subr.bf16.mxu0 0
    %472 = vmatpush2.bf16.msra.mxu0 0
    %473 = vmatprep.subr.bf16.mxu0 0
    %474 = vmatpush2.bf16.msra.mxu0 0
    %475 = vmatprep.subr.bf16.mxu0 0
    %476 = vmatpush2.bf16.msra.mxu0 0
    %477 = vmatprep.subr.bf16.mxu0 0
    %478 = vmatpush2.bf16.msra.mxu0 0
    %479 = vmatprep.mubr.bf16.mxu0 0
    %480 = vmatmul.mubr.bf16.gmra.mxu0 %v178
    %v481 = vpop.f32.mrf.mxu0
    %v482 = vadd.f32 %v85, %v481
    %v483 = vpop.f32.mrf.mxu0
    %v484 = vadd.f32 %v85, %v483
    %v485 = vpop.f32.mrf.mxu0
    %v486 = vadd.f32 %v90, %v485
    %v487 = vpop.f32.mrf.mxu0
    %v488 = vadd.f32 %v90, %v487
    %489 = vmatprep.mubr.bf16.mxu0 0
    %490 = vmatmul.mubr.bf16.gmra.mxu0 %v181
    %v491 = vpop.f32.mrf.mxu0
    %v492 = vadd.f32 %v95, %v491
    %v493 = vpop.f32.mrf.mxu0
    %v494 = vadd.f32 %v95, %v493
    %v495 = vpop.f32.mrf.mxu0
    %v496 = vadd.f32 %v100, %v495
    %v497 = vpop.f32.mrf.mxu0
    %v498 = vadd.f32 %v100, %v497
    %499 = vdwg.mxu0
    %500 = vmatprep.subr.bf16.mxu0 0
    %501 = vmatpush1.bf16.msra.mxu0 0
    %502 = vmatprep.subr.bf16.mxu0 0
    %503 = vmatpush1.bf16.msra.mxu0 0
    %504 = vmatprep.subr.bf16.mxu0 0
    %505 = vmatpush1.bf16.msra.mxu0 0
    %506 = vmatprep.subr.bf16.mxu0 0
    %507 = vmatpush1.bf16.msra.mxu0 0
    %508 = vmatprep.subr.bf16.mxu0 0
    %509 = vmatpush1.bf16.msra.mxu0 0
    %510 = vmatprep.subr.bf16.mxu0 0
    %511 = vmatpush1.bf16.msra.mxu0 0
    %512 = vmatprep.subr.bf16.mxu0 0
    %513 = vmatpush1.bf16.msra.mxu0 0
    %514 = vmatprep.subr.bf16.mxu0 %v221
    %515 = vmatpush1.bf16.msra.mxu0 %v218
    %516 = vmatprep.subr.bf16.mxu0 0
    %517 = vmatpush2.bf16.msra.mxu0 0
    %518 = vmatprep.subr.bf16.mxu0 0
    %519 = vmatpush2.bf16.msra.mxu0 0
    %520 = vmatprep.subr.bf16.mxu0 0
    %521 = vmatpush2.bf16.msra.mxu0 0
    %522 = vmatprep.subr.bf16.mxu0 0
    %523 = vmatpush2.bf16.msra.mxu0 0
    %524 = vmatprep.subr.bf16.mxu0 0
    %525 = vmatpush2.bf16.msra.mxu0 0
    %526 = vmatprep.subr.bf16.mxu0 0
    %527 = vmatpush2.bf16.msra.mxu0 0
    %528 = vmatprep.subr.bf16.mxu0 0
    %529 = vmatpush2.bf16.msra.mxu0 0
    %530 = vmatprep.subr.bf16.mxu0 0
    %531 = vmatpush2.bf16.msra.mxu0 0
    %532 = vmatprep.mubr.bf16.mxu0 0
    %533 = vmatmul.mubr.bf16.gmra.mxu0 %v178
    %v534 = vpop.f32.mrf.mxu0
    %v535 = vadd.f32 %v85, %v534
    %v536 = vpop.f32.mrf.mxu0
    %v537 = vadd.f32 %v85, %v536
    %v538 = vpop.f32.mrf.mxu0
    %v539 = vadd.f32 %v90, %v538
    %v540 = vpop.f32.mrf.mxu0
    %v541 = vadd.f32 %v90, %v540
    %542 = vmatprep.mubr.bf16.mxu0 0
    %543 = vmatmul.mubr.bf16.gmra.mxu0 %v181
    %v544 = vpop.f32.mrf.mxu0
    %v545 = vadd.f32 %v95, %v544
    %v546 = vpop.f32.mrf.mxu0
    %v547 = vadd.f32 %v95, %v546
    %v548 = vpop.f32.mrf.mxu0
    %v549 = vadd.f32 %v100, %v548
    %v550 = vpop.f32.mrf.mxu0
    %v551 = vadd.f32 %v100, %v550
    %552 = vdwg.mxu0
    %553 = vmatprep.subr.bf16.mxu0 0
    %554 = vmatpush1.bf16.msra.mxu0 0
    %555 = vmatprep.subr.bf16.mxu0 0
    %556 = vmatpush1.bf16.msra.mxu0 0
    %557 = vmatprep.subr.bf16.mxu0 0
    %558 = vmatpush1.bf16.msra.mxu0 0
    %559 = vmatprep.subr.bf16.mxu0 0
    %560 = vmatpush1.bf16.msra.mxu0 0
    %561 = vmatprep.subr.bf16.mxu0 0
    %562 = vmatpush1.bf16.msra.mxu0 0
    %563 = vmatprep.subr.bf16.mxu0 0
    %564 = vmatpush1.bf16.msra.mxu0 0
    %565 = vmatprep.subr.bf16.mxu0 0
    %566 = vmatpush1.bf16.msra.mxu0 0
    %567 = vmatprep.subr.bf16.mxu0 %v227
    %568 = vmatpush1.bf16.msra.mxu0 %v224
    %569 = vmatprep.subr.bf16.mxu0 0
    %570 = vmatpush2.bf16.msra.mxu0 0
    %571 = vmatprep.subr.bf16.mxu0 0
    %572 = vmatpush2.bf16.msra.mxu0 0
    %573 = vmatprep.subr.bf16.mxu0 0
    %574 = vmatpush2.bf16.msra.mxu0 0
    %575 = vmatprep.subr.bf16.mxu0 0
    %576 = vmatpush2.bf16.msra.mxu0 0
    %577 = vmatprep.subr.bf16.mxu0 0
    %578 = vmatpush2.bf16.msra.mxu0 0
    %579 = vmatprep.subr.bf16.mxu0 0
    %580 = vmatpush2.bf16.msra.mxu0 0
    %581 = vmatprep.subr.bf16.mxu0 0
    %582 = vmatpush2.bf16.msra.mxu0 0
    %583 = vmatprep.subr.bf16.mxu0 0
    %584 = vmatpush2.bf16.msra.mxu0 0
    %585 = vmatprep.mubr.bf16.mxu0 0
    %586 = vmatmul.mubr.bf16.gmra.mxu0 %v178
    %v587 = vpop.f32.mrf.mxu0
    %v588 = vadd.f32 %v85, %v587
    %v589 = vpop.f32.mrf.mxu0
    %v590 = vadd.f32 %v85, %v589
    %v591 = vpop.f32.mrf.mxu0
    %v592 = vadd.f32 %v90, %v591
    %v593 = vpop.f32.mrf.mxu0
    %v594 = vadd.f32 %v90, %v593
    %595 = vmatprep.mubr.bf16.mxu0 0
    %596 = vmatmul.mubr.bf16.gmra.mxu0 %v181
    %v597 = vpop.f32.mrf.mxu0
    %v598 = vadd.f32 %v95, %v597
    %v599 = vpop.f32.mrf.mxu0
    %v600 = vadd.f32 %v95, %v599
    %v601 = vpop.f32.mrf.mxu0
    %v602 = vadd.f32 %v100, %v601
    %v603 = vpop.f32.mrf.mxu0
    %v604 = vadd.f32 %v100, %v603
    %605 = vdwg.mxu0
    %606 = vmatprep.subr.bf16.mxu0 0
    %607 = vmatpush1.bf16.msra.mxu0 0
    %608 = vmatprep.subr.bf16.mxu0 0
    %609 = vmatpush1.bf16.msra.mxu0 0
    %610 = vmatprep.subr.bf16.mxu0 0
    %611 = vmatpush1.bf16.msra.mxu0 0
    %612 = vmatprep.subr.bf16.mxu0 0
    %613 = vmatpush1.bf16.msra.mxu0 0
    %614 = vmatprep.subr.bf16.mxu0 0
    %615 = vmatpush1.bf16.msra.mxu0 0
    %616 = vmatprep.subr.bf16.mxu0 0
    %617 = vmatpush1.bf16.msra.mxu0 0
    %618 = vmatprep.subr.bf16.mxu0 0
    %619 = vmatpush1.bf16.msra.mxu0 0
    %620 = vmatprep.subr.bf16.mxu0 %v233
    %621 = vmatpush1.bf16.msra.mxu0 %v230
    %622 = vmatprep.subr.bf16.mxu0 0
    %623 = vmatpush2.bf16.msra.mxu0 0
    %624 = vmatprep.subr.bf16.mxu0 0
    %625 = vmatpush2.bf16.msra.mxu0 0
    %626 = vmatprep.subr.bf16.mxu0 0
    %627 = vmatpush2.bf16.msra.mxu0 0
    %628 = vmatprep.subr.bf16.mxu0 0
    %629 = vmatpush2.bf16.msra.mxu0 0
    %630 = vmatprep.subr.bf16.mxu0 0
    %631 = vmatpush2.bf16.msra.mxu0 0
    %632 = vmatprep.subr.bf16.mxu0 0
    %633 = vmatpush2.bf16.msra.mxu0 0
    %634 = vmatprep.subr.bf16.mxu0 0
    %635 = vmatpush2.bf16.msra.mxu0 0
    %636 = vmatprep.subr.bf16.mxu0 0
    %637 = vmatpush2.bf16.msra.mxu0 0
    %638 = vmatprep.mubr.bf16.mxu0 0
    %639 = vmatmul.mubr.bf16.gmra.mxu0 %v178
    %v640 = vpop.f32.mrf.mxu0
    %v641 = vadd.f32 %v85, %v640
    %v642 = vpop.f32.mrf.mxu0
    %v643 = vadd.f32 %v85, %v642
    %v644 = vpop.f32.mrf.mxu0
    %v645 = vadd.f32 %v90, %v644
    %v646 = vpop.f32.mrf.mxu0
    %v647 = vadd.f32 %v90, %v646
    %648 = vmatprep.mubr.bf16.mxu0 0
    %649 = vmatmul.mubr.bf16.gmra.mxu0 %v181
    %v650 = vpop.f32.mrf.mxu0
    %v651 = vadd.f32 %v95, %v650
    %v652 = vpop.f32.mrf.mxu0
    %v653 = vadd.f32 %v95, %v652
    %v654 = vpop.f32.mrf.mxu0
    %v655 = vadd.f32 %v100, %v654
    %v656 = vpop.f32.mrf.mxu0
    %v657 = vadd.f32 %v100, %v656
    %658 = vdwg.mxu0
    %v659 = vmax.f32 %v270, 0.0
    %v660 = vmax.f32 %v272, 0.0
    %v661 = vmax.f32 %v323, 0.0
    %v662 = vmax.f32 %v325, 0.0
    %v663 = vmax.f32 %v376, 0.0
    %v664 = vmax.f32 %v378, 0.0
    %v665 = vmax.f32 %v429, 0.0
    %v666 = vmax.f32 %v431, 0.0
    %v667 = vmax.f32 %v482, 0.0
    %v668 = vmax.f32 %v484, 0.0
    %v669 = vmax.f32 %v535, 0.0
    %v670 = vmax.f32 %v537, 0.0
    %v671 = vmax.f32 %v588, 0.0
    %v672 = vmax.f32 %v590, 0.0
    %v673 = vmax.f32 %v641, 0.0
    %v674 = vmax.f32 %v643, 0.0
    %v675 = vmax.f32 %v274, 0.0
    %v676 = vmax.f32 %v276, 0.0
    %v677 = vmax.f32 %v327, 0.0
    %v678 = vmax.f32 %v329, 0.0
    %v679 = vmax.f32 %v380, 0.0
    %v680 = vmax.f32 %v382, 0.0
    %v681 = vmax.f32 %v433, 0.0
    %v682 = vmax.f32 %v435, 0.0
    %v683 = vmax.f32 %v486, 0.0
    %v684 = vmax.f32 %v488, 0.0
    %v685 = vmax.f32 %v539, 0.0
    %v686 = vmax.f32 %v541, 0.0
    %v687 = vmax.f32 %v592, 0.0
    %v688 = vmax.f32 %v594, 0.0
    %v689 = vmax.f32 %v645, 0.0
    %v690 = vmax.f32 %v647, 0.0
    %v691 = vmax.f32 %v280, 0.0
    %v692 = vmax.f32 %v282, 0.0
    %v693 = vmax.f32 %v333, 0.0
    %v694 = vmax.f32 %v335, 0.0
    %v695 = vmax.f32 %v386, 0.0
    %v696 = vmax.f32 %v388, 0.0
    %v697 = vmax.f32 %v439, 0.0
    %v698 = vmax.f32 %v441, 0.0
    %v699 = vmax.f32 %v492, 0.0
    %v700 = vmax.f32 %v494, 0.0
    %v701 = vmax.f32 %v545, 0.0
    %v702 = vmax.f32 %v547, 0.0
    %v703 = vmax.f32 %v598, 0.0
    %v704 = vmax.f32 %v600, 0.0
    %v705 = vmax.f32 %v651, 0.0
    %v706 = vmax.f32 %v653, 0.0
    %v707 = vmax.f32 %v284, 0.0
    %v708 = vmax.f32 %v286, 0.0
    %v709 = vmax.f32 %v337, 0.0
    %v710 = vmax.f32 %v339, 0.0
    %v711 = vmax.f32 %v390, 0.0
    %v712 = vmax.f32 %v392, 0.0
    %v713 = vmax.f32 %v443, 0.0
    %v714 = vmax.f32 %v445, 0.0
    %v715 = vmax.f32 %v496, 0.0
    %v716 = vmax.f32 %v498, 0.0
    %v717 = vmax.f32 %v549, 0.0
    %v718 = vmax.f32 %v551, 0.0
    %v719 = vmax.f32 %v602, 0.0
    %v720 = vmax.f32 %v604, 0.0
    %v721 = vmax.f32 %v655, 0.0
    %v722 = vmax.f32 %v657, 0.0
    %v723 = vadd.f32 %v659, %v660
    %724 = vadd.xlane.f32.xlu0 %v723
    %v725 = vpop.xlane.xlu0 %724
    %v726 = vadd.f32 %v675, %v676
    %727 = vadd.xlane.f32.xlu0 %v726
    %v728 = vpop.xlane.xlu0 %727
    %v729 = vadd.f32 %v691, %v692
    %730 = vadd.xlane.f32.xlu0 %v729
    %v731 = vpop.xlane.xlu0 %730
    %v732 = vadd.f32 %v707, %v708
    %733 = vadd.xlane.f32.xlu0 %v732
    %v734 = vpop.xlane.xlu0 %733
    %v735 = vadd.f32 %v661, %v662
    %736 = vadd.xlane.f32.xlu0 %v735
    %v737 = vpop.xlane.xlu0 %736
    %v738 = vadd.f32 %v677, %v678
    %739 = vadd.xlane.f32.xlu0 %v738
    %v740 = vpop.xlane.xlu0 %739
    %v741 = vadd.f32 %v693, %v694
    %742 = vadd.xlane.f32.xlu0 %v741
    %v743 = vpop.xlane.xlu0 %742
    %v744 = vadd.f32 %v709, %v710
    %745 = vadd.xlane.f32.xlu0 %v744
    %v746 = vpop.xlane.xlu0 %745
    %v747 = vadd.f32 %v663, %v664
    %748 = vadd.xlane.f32.xlu0 %v747
    %v749 = vpop.xlane.xlu0 %748
    %v750 = vadd.f32 %v679, %v680
    %751 = vadd.xlane.f32.xlu0 %v750
    %v752 = vpop.xlane.xlu0 %751
    %v753 = vadd.f32 %v695, %v696
    %754 = vadd.xlane.f32.xlu0 %v753
    %v755 = vpop.xlane.xlu0 %754
    %v756 = vadd.f32 %v711, %v712
    %757 = vadd.xlane.f32.xlu0 %v756
    %v758 = vpop.xlane.xlu0 %757
    %v759 = vadd.f32 %v665, %v666
    %760 = vadd.xlane.f32.xlu0 %v759
    %v761 = vpop.xlane.xlu0 %760
    %v762 = vadd.f32 %v681, %v682
    %763 = vadd.xlane.f32.xlu0 %v762
    %v764 = vpop.xlane.xlu0 %763
    %v765 = vadd.f32 %v697, %v698
    %766 = vadd.xlane.f32.xlu0 %v765
    %v767 = vpop.xlane.xlu0 %766
    %v768 = vadd.f32 %v713, %v714
    %769 = vadd.xlane.f32.xlu0 %v768
    %v770 = vpop.xlane.xlu0 %769
    %v771 = vadd.f32 %v667, %v668
    %772 = vadd.xlane.f32.xlu0 %v771
    %v773 = vpop.xlane.xlu0 %772
    %v774 = vadd.f32 %v683, %v684
    %775 = vadd.xlane.f32.xlu0 %v774
    %v776 = vpop.xlane.xlu0 %775
    %v777 = vadd.f32 %v699, %v700
    %778 = vadd.xlane.f32.xlu0 %v777
    %v779 = vpop.xlane.xlu0 %778
    %v780 = vadd.f32 %v715, %v716
    %781 = vadd.xlane.f32.xlu0 %v780
    %v782 = vpop.xlane.xlu0 %781
    %v783 = vadd.f32 %v669, %v670
    %784 = vadd.xlane.f32.xlu0 %v783
    %v785 = vpop.xlane.xlu0 %784
    %v786 = vadd.f32 %v685, %v686
    %787 = vadd.xlane.f32.xlu0 %v786
    %v788 = vpop.xlane.xlu0 %787
    %v789 = vadd.f32 %v701, %v702
    %790 = vadd.xlane.f32.xlu0 %v789
    %v791 = vpop.xlane.xlu0 %790
    %v792 = vadd.f32 %v717, %v718
    %793 = vadd.xlane.f32.xlu0 %v792
    %v794 = vpop.xlane.xlu0 %793
    %v795 = vadd.f32 %v671, %v672
    %796 = vadd.xlane.f32.xlu0 %v795
    %v797 = vpop.xlane.xlu0 %796
    %v798 = vadd.f32 %v687, %v688
    %799 = vadd.xlane.f32.xlu0 %v798
    %v800 = vpop.xlane.xlu0 %799
    %v801 = vadd.f32 %v703, %v704
    %802 = vadd.xlane.f32.xlu0 %v801
    %v803 = vpop.xlane.xlu0 %802
    %v804 = vadd.f32 %v719, %v720
    %805 = vadd.xlane.f32.xlu0 %v804
    %v806 = vpop.xlane.xlu0 %805
    %v807 = vadd.f32 %v673, %v674
    %808 = vadd.xlane.f32.xlu0 %v807
    %v809 = vpop.xlane.xlu0 %808
    %v810 = vadd.f32 %v689, %v690
    %811 = vadd.xlane.f32.xlu0 %v810
    %v812 = vpop.xlane.xlu0 %811
    %v813 = vadd.f32 %v705, %v706
    %814 = vadd.xlane.f32.xlu0 %v813
    %v815 = vpop.xlane.xlu0 %814
    %v816 = vadd.f32 %v721, %v722
    %817 = vadd.xlane.f32.xlu0 %v816
    %v818 = vpop.xlane.xlu0 %817
    %vm819 = vcmask 7168
    %v820 = vsel %vm819, %v725, %v737
    %v821 = vsel %vm819, %v728, %v740
    %v822 = vsel %vm819, %v731, %v743
    %v823 = vsel %vm819, %v734, %v746
    %vm824 = vcmask 15360
    %v825 = vsel %vm824, %v820, %v749
    %v826 = vsel %vm824, %v821, %v752
    %v827 = vsel %vm824, %v822, %v755
    %v828 = vsel %vm824, %v823, %v758
    %vm829 = vcmask 23552
    %v830 = vsel %vm829, %v825, %v761
    %v831 = vsel %vm829, %v826, %v764
    %v832 = vsel %vm829, %v827, %v767
    %v833 = vsel %vm829, %v828, %v770
    %vm834 = vcmask 31744
    %v835 = vsel %vm834, %v830, %v773
    %v836 = vsel %vm834, %v831, %v776
    %v837 = vsel %vm834, %v832, %v779
    %v838 = vsel %vm834, %v833, %v782
    %vm839 = vcmask 39936
    %v840 = vsel %vm839, %v835, %v785
    %v841 = vsel %vm839, %v836, %v788
    %v842 = vsel %vm839, %v837, %v791
    %v843 = vsel %vm839, %v838, %v794
    %vm844 = vcmask 48128
    %v845 = vsel %vm844, %v840, %v797
    %v846 = vsel %vm844, %v841, %v800
    %v847 = vsel %vm844, %v842, %v803
    %v848 = vsel %vm844, %v843, %v806
    %vm849 = vcmask 56320
    %v850 = vsel %vm849, %v845, %v809
    %v851 = vsel %vm849, %v846, %v812
    %v852 = vsel %vm849, %v847, %v815
    %v853 = vsel %vm849, %v848, %v818
    %v854 = vmul.f32 %v850, 0.00390625
    %v855 = vmul.f32 %v851, 0.00390625
    %v856 = vmul.f32 %v852, 0.00390625
    %v857 = vmul.f32 %v853, 0.00390625
    %859 = vset.pattern.permute.xlu0 0
    %860 = vperm.xlu0 %859, %v79
    %v861 = vpop.permute.xlu0 %860
    %v863 = vlaneseq
    %v864 = vshrl.u32 %v863, 7
    %v865 = vsub.s32 0, %v864
    %v866 = vrot.slane %v861, %v865
    %vm867 = vcmask 261120
    %v869 = vsel %vm867, %v78, 0
    %871 = vmatprep.subr.mxu0 0.0
    %872 = vmatpush1.msra.mxu0 0.0
    %873 = vmatprep.subr.mxu0 0.0
    %874 = vmatpush1.msra.mxu0 0.0
    %875 = vmatprep.subr.mxu0 0.0
    %876 = vmatpush1.msra.mxu0 0.0
    %877 = vmatprep.subr.mxu0 0.0
    %878 = vmatpush1.msra.mxu0 0.0
    %879 = vmatprep.subr.mxu0 0.0
    %880 = vmatpush1.msra.mxu0 0.0
    %881 = vmatprep.subr.mxu0 0.0
    %882 = vmatpush1.msra.mxu0 0.0
    %883 = vmatprep.subr.mxu0 0.0
    %884 = vmatpush1.msra.mxu0 0.0
    %885 = vmatprep.subr.mxu0 0.0
    %886 = vmatpush1.msra.mxu0 0.0
    %887 = vmatprep.subr.mxu0 0.0
    %888 = vmatpush1.msra.mxu0 0.0
    %889 = vmatprep.subr.mxu0 0.0
    %890 = vmatpush1.msra.mxu0 0.0
    %891 = vmatprep.subr.mxu0 0.0
    %892 = vmatpush1.msra.mxu0 0.0
    %893 = vmatprep.subr.mxu0 0.0
    %894 = vmatpush1.msra.mxu0 0.0
    %895 = vmatprep.subr.mxu0 0.0
    %896 = vmatpush1.msra.mxu0 %v857
    %897 = vmatprep.subr.mxu0 0.0
    %898 = vmatpush1.msra.mxu0 %v856
    %899 = vmatprep.subr.mxu0 0.0
    %900 = vmatpush1.msra.mxu0 %v855
    %901 = vmatprep.subr.mxu0 0.0
    %902 = vmatpush1.msra.mxu0 %v854
    %903 = vmatprep.subr.mxu0 0.0
    %904 = vmatpush2.msra.mxu0 0.0
    %905 = vmatprep.subr.mxu0 0.0
    %906 = vmatpush2.msra.mxu0 0.0
    %907 = vmatprep.subr.mxu0 0.0
    %908 = vmatpush2.msra.mxu0 0.0
    %909 = vmatprep.subr.mxu0 0.0
    %910 = vmatpush2.msra.mxu0 0.0
    %911 = vmatprep.subr.mxu0 0.0
    %912 = vmatpush2.msra.mxu0 0.0
    %913 = vmatprep.subr.mxu0 0.0
    %914 = vmatpush2.msra.mxu0 0.0
    %915 = vmatprep.subr.mxu0 0.0
    %916 = vmatpush2.msra.mxu0 0.0
    %917 = vmatprep.subr.mxu0 0.0
    %918 = vmatpush2.msra.mxu0 0.0
    %919 = vmatprep.subr.mxu0 0.0
    %920 = vmatpush2.msra.mxu0 0.0
    %921 = vmatprep.subr.mxu0 0.0
    %922 = vmatpush2.msra.mxu0 0.0
    %923 = vmatprep.subr.mxu0 0.0
    %924 = vmatpush2.msra.mxu0 0.0
    %925 = vmatprep.subr.mxu0 0.0
    %926 = vmatpush2.msra.mxu0 0.0
    %927 = vmatprep.subr.mxu0 0.0
    %928 = vmatpush2.msra.mxu0 0.0
    %929 = vmatprep.subr.mxu0 0.0
    %930 = vmatpush2.msra.mxu0 0.0
    %931 = vmatprep.subr.mxu0 0.0
    %932 = vmatpush2.msra.mxu0 0.0
    %933 = vmatprep.subr.mxu0 0.0
    %934 = vmatpush2.msra.mxu0 0.0
    %935 = vmatprep.mubr.f32.mxu0 0.0
    %936 = vmatmul.mubr.f32.gmra.mxu0 %v869
    %v937 = vpop.f32.mrf.mxu0
    %v938 = vadd.f32 %v866, %v937
    %v939 = vpop.f32.mrf.mxu0
    %940 = vdwg.mxu0
    %v941 = vmax.f32 %v938, 0.0
    %v942 = vlaneseq
    %v943 = vand.u32 %v942, 127
    %v944 = vstv %s53
    %vm945 = vcmp.lt.s32.totalorder %v943, %v944
    %v946 = vsel %vm945, %v941, 0.0
    %vm947 = vcmask 64512
    %v949 = vsel %vm947, %v946, 0
    %951 = vmatprep.subr.mxu0 0.0
    %952 = vmatpush1.msra.mxu0 0.0
    %953 = vmatprep.subr.mxu0 0.0
    %954 = vmatpush1.msra.mxu0 0.0
    %955 = vmatprep.subr.mxu0 0.0
    %956 = vmatpush1.msra.mxu0 0.0
    %957 = vmatprep.subr.mxu0 0.0
    %958 = vmatpush1.msra.mxu0 0.0
    %959 = vmatprep.subr.mxu0 0.0
    %960 = vmatpush1.msra.mxu0 0.0
    %961 = vmatprep.subr.mxu0 0.0
    %962 = vmatpush1.msra.mxu0 0.0
    %963 = vmatprep.subr.mxu0 0.0
    %964 = vmatpush1.msra.mxu0 0.0
    %965 = vmatprep.subr.mxu0 0.0
    %966 = vmatpush1.msra.mxu0 0.0
    %967 = vmatprep.subr.mxu0 0.0
    %968 = vmatpush1.msra.mxu0 0.0
    %969 = vmatprep.subr.mxu0 0.0
    %970 = vmatpush1.msra.mxu0 0.0
    %971 = vmatprep.subr.mxu0 0.0
    %972 = vmatpush1.msra.mxu0 0.0
    %973 = vmatprep.subr.mxu0 0.0
    %974 = vmatpush1.msra.mxu0 0.0
    %975 = vmatprep.subr.mxu0 0.0
    %976 = vmatpush1.msra.mxu0 0.0
    %977 = vmatprep.subr.mxu0 0.0
    %978 = vmatpush1.msra.mxu0 0.0
    %979 = vmatprep.subr.mxu0 0.0
    %980 = vmatpush1.msra.mxu0 0.0
    %981 = vmatprep.subr.mxu0 0.0
    %982 = vmatpush1.msra.mxu0 %v80
    %983 = vmatprep.subr.mxu0 0.0
    %984 = vmatpush2.msra.mxu0 0.0
    %985 = vmatprep.subr.mxu0 0.0
    %986 = vmatpush2.msra.mxu0 0.0
    %987 = vmatprep.subr.mxu0 0.0
    %988 = vmatpush2.msra.mxu0 0.0
    %989 = vmatprep.subr.mxu0 0.0
    %990 = vmatpush2.msra.mxu0 0.0
    %991 = vmatprep.subr.mxu0 0.0
    %992 = vmatpush2.msra.mxu0 0.0
    %993 = vmatprep.subr.mxu0 0.0
    %994 = vmatpush2.msra.mxu0 0.0
    %995 = vmatprep.subr.mxu0 0.0
    %996 = vmatpush2.msra.mxu0 0.0
    %997 = vmatprep.subr.mxu0 0.0
    %998 = vmatpush2.msra.mxu0 0.0
    %999 = vmatprep.subr.mxu0 0.0
    %1000 = vmatpush2.msra.mxu0 0.0
    %1001 = vmatprep.subr.mxu0 0.0
    %1002 = vmatpush2.msra.mxu0 0.0
    %1003 = vmatprep.subr.mxu0 0.0
    %1004 = vmatpush2.msra.mxu0 0.0
    %1005 = vmatprep.subr.mxu0 0.0
    %1006 = vmatpush2.msra.mxu0 0.0
    %1007 = vmatprep.subr.mxu0 0.0
    %1008 = vmatpush2.msra.mxu0 0.0
    %1009 = vmatprep.subr.mxu0 0.0
    %1010 = vmatpush2.msra.mxu0 0.0
    %1011 = vmatprep.subr.mxu0 0.0
    %1012 = vmatpush2.msra.mxu0 0.0
    %1013 = vmatprep.subr.mxu0 0.0
    %1014 = vmatpush2.msra.mxu0 0.0
    %1015 = vmatprep.mubr.f32.mxu0 0.0
    %1016 = vmatmul.mubr.f32.gmra.mxu0 %v949
    %v1017 = vpop.f32.mrf.mxu0
    %v1018 = vadd.f32 %v81, %v1017
    %v1019 = vpop.f32.mrf.mxu0
    %1020 = vdwg.mxu0
    %v1021 = vsub.f32 0.0, %v1018
    %v1022 = vmul.f32 %v1021, 1.442695
    %v1023 = vpow.pop %v1022
    %v1024 = vadd.f32 %v1023, 1.0
    %v1025 = vrcp.pop %v1024
    %v1026 = vmul.f32 1.0, %v1025
    %1027 = vxpose.xlu0.b32.start [1/16] %v854, 128
    %1028 = vxpose.xlu0.b32.cont [2/16] %v855, 128
    %1029 = vxpose.xlu0.b32.cont [3/16] %v856, 128
    %1030 = vxpose.xlu0.b32.cont [4/16] %v857, 128
    %1031 = vxpose.xlu0.b32.cont [5/16] 0.0, 128
    %1032 = vxpose.xlu0.b32.cont [6/16] 0.0, 128
    %1033 = vxpose.xlu0.b32.cont [7/16] 0.0, 128
    %1034 = vxpose.xlu0.b32.cont [8/16] 0.0, 128
    %1035 = vxpose.xlu0.b32.cont [9/16] 0.0, 128
    %1036 = vxpose.xlu0.b32.cont [10/16] 0.0, 128
    %1037 = vxpose.xlu0.b32.cont [11/16] 0.0, 128
    %1038 = vxpose.xlu0.b32.cont [12/16] 0.0, 128
    %1039 = vxpose.xlu0.b32.cont [13/16] 0.0, 128
    %1040 = vxpose.xlu0.b32.cont [14/16] 0.0, 128
    %1041 = vxpose.xlu0.b32.cont [15/16] 0.0, 128
    %1042 = vxpose.xlu0.b32.end [16/16] 0.0, 128
    %v1043 = vpop.trf.xlu0
    %v1044 = vpop.trf.xlu0
    %v1045 = vpop.trf.xlu0
    %v1046 = vpop.trf.xlu0
    %v1047 = vpop.trf.xlu0
    %v1048 = vpop.trf.xlu0
    %v1049 = vpop.trf.xlu0
    %v1050 = vpop.trf.xlu0
    %v1051 = vpop.trf.xlu0
    %v1052 = vpop.trf.xlu0
    %v1053 = vpop.trf.xlu0
    %v1054 = vpop.trf.xlu0
    %v1055 = vpop.trf.xlu0
    %v1056 = vpop.trf.xlu0
    %v1057 = vpop.trf.xlu0
    %v1058 = vpop.trf.xlu0
    %v1059 = vld [vmem:[%s8] sm:$0x1]
    %v1060 = vld [vmem:[%s9] sm:$0xff]
    %v1061 = vld [vmem:[%s9 + $0x8] sm:$0xff]
    %v1062 = vld [vmem:[%s9 + $0x10] sm:$0xff]
    %v1063 = vld [vmem:[%s9 + $0x18] sm:$0xff]
    %v1064 = vld [vmem:[%s10] sm:$0x1]
    %v1065 = vld [vmem:[%s11] sm:$0xff]
    %v1066 = vld [vmem:[%s11 + $0x8] sm:$0xff]
    %v1067 = vld [vmem:[#allocation4] sm:$0x1]
    %v1069 = vsel %vm867, %v1059, 0
    %1071 = vmatprep.subr.mxu0 0.0
    %1072 = vmatpush1.msra.mxu0 0.0
    %1073 = vmatprep.subr.mxu0 0.0
    %1074 = vmatpush1.msra.mxu0 0.0
    %1075 = vmatprep.subr.mxu0 0.0
    %1076 = vmatpush1.msra.mxu0 0.0
    %1077 = vmatprep.subr.mxu0 0.0
    %1078 = vmatpush1.msra.mxu0 0.0
    %1079 = vmatprep.subr.mxu0 0.0
    %1080 = vmatpush1.msra.mxu0 0.0
    %1081 = vmatprep.subr.mxu0 0.0
    %1082 = vmatpush1.msra.mxu0 0.0
    %1083 = vmatprep.subr.mxu0 0.0
    %1084 = vmatpush1.msra.mxu0 0.0
    %1085 = vmatprep.subr.mxu0 0.0
    %1086 = vmatpush1.msra.mxu0 0.0
    %1087 = vmatprep.subr.mxu0 0.0
    %1088 = vmatpush1.msra.mxu0 0.0
    %1089 = vmatprep.subr.mxu0 0.0
    %1090 = vmatpush1.msra.mxu0 0.0
    %1091 = vmatprep.subr.mxu0 0.0
    %1092 = vmatpush1.msra.mxu0 0.0
    %1093 = vmatprep.subr.mxu0 0.0
    %1094 = vmatpush1.msra.mxu0 0.0
    %1095 = vmatprep.subr.mxu0 0.0
    %1096 = vmatpush1.msra.mxu0 %v1063
    %1097 = vmatprep.subr.mxu0 0.0
    %1098 = vmatpush1.msra.mxu0 %v1062
    %1099 = vmatprep.subr.mxu0 0.0
    %1100 = vmatpush1.msra.mxu0 %v1061
    %1101 = vmatprep.subr.mxu0 0.0
    %1102 = vmatpush1.msra.mxu0 %v1060
    %1103 = vmatprep.subr.mxu0 0.0
    %1104 = vmatpush2.msra.mxu0 0.0
    %1105 = vmatprep.subr.mxu0 0.0
    %1106 = vmatpush2.msra.mxu0 0.0
    %1107 = vmatprep.subr.mxu0 0.0
    %1108 = vmatpush2.msra.mxu0 0.0
    %1109 = vmatprep.subr.mxu0 0.0
    %1110 = vmatpush2.msra.mxu0 0.0
    %1111 = vmatprep.subr.mxu0 0.0
    %1112 = vmatpush2.msra.mxu0 0.0
    %1113 = vmatprep.subr.mxu0 0.0
    %1114 = vmatpush2.msra.mxu0 0.0
    %1115 = vmatprep.subr.mxu0 0.0
    %1116 = vmatpush2.msra.mxu0 0.0
    %1117 = vmatprep.subr.mxu0 0.0
    %1118 = vmatpush2.msra.mxu0 0.0
    %1119 = vmatprep.subr.mxu0 0.0
    %1120 = vmatpush2.msra.mxu0 0.0
    %1121 = vmatprep.subr.mxu0 0.0
    %1122 = vmatpush2.msra.mxu0 0.0
    %1123 = vmatprep.subr.mxu0 0.0
    %1124 = vmatpush2.msra.mxu0 0.0
    %1125 = vmatprep.subr.mxu0 0.0
    %1126 = vmatpush2.msra.mxu0 0.0
    %1127 = vmatprep.subr.mxu0 0.0
    %1128 = vmatpush2.msra.mxu0 0.0
    %1129 = vmatprep.subr.mxu0 0.0
    %1130 = vmatpush2.msra.mxu0 0.0
    %1131 = vmatprep.subr.mxu0 0.0
    %1132 = vmatpush2.msra.mxu0 0.0
    %1133 = vmatprep.subr.mxu0 0.0
    %1134 = vmatpush2.msra.mxu0 0.0
    %1135 = vmatprep.mubr.f32.mxu0 0.0
    %1136 = vmatmul.mubr.f32.gmra.mxu0 %v1069
    %v1137 = vpop.f32.mrf.mxu0
    %v1138 = vadd.f32 %v1064, %v1137
    %v1139 = vpop.f32.mrf.mxu0
    %1140 = vdwg.mxu0
    %v1141 = vmax.f32 %v1138, 0.0
    %vm1142 = vcmask 130048
    %v1144 = vsel %vm1142, %v1141, 0
    %1146 = vmatprep.subr.mxu0 0.0
    %1147 = vmatpush1.msra.mxu0 0.0
    %1148 = vmatprep.subr.mxu0 0.0
    %1149 = vmatpush1.msra.mxu0 0.0
    %1150 = vmatprep.subr.mxu0 0.0
    %1151 = vmatpush1.msra.mxu0 0.0
    %1152 = vmatprep.subr.mxu0 0.0
    %1153 = vmatpush1.msra.mxu0 0.0
    %1154 = vmatprep.subr.mxu0 0.0
    %1155 = vmatpush1.msra.mxu0 0.0
    %1156 = vmatprep.subr.mxu0 0.0
    %1157 = vmatpush1.msra.mxu0 0.0
    %1158 = vmatprep.subr.mxu0 0.0
    %1159 = vmatpush1.msra.mxu0 0.0
    %1160 = vmatprep.subr.mxu0 0.0
    %1161 = vmatpush1.msra.mxu0 0.0
    %1162 = vmatprep.subr.mxu0 0.0
    %1163 = vmatpush1.msra.mxu0 0.0
    %1164 = vmatprep.subr.mxu0 0.0
    %1165 = vmatpush1.msra.mxu0 0.0
    %1166 = vmatprep.subr.mxu0 0.0
    %1167 = vmatpush1.msra.mxu0 0.0
    %1168 = vmatprep.subr.mxu0 0.0
    %1169 = vmatpush1.msra.mxu0 0.0
    %1170 = vmatprep.subr.mxu0 0.0
    %1171 = vmatpush1.msra.mxu0 0.0
    %1172 = vmatprep.subr.mxu0 0.0
    %1173 = vmatpush1.msra.mxu0 0.0
    %1174 = vmatprep.subr.mxu0 0.0
    %1175 = vmatpush1.msra.mxu0 %v1066
    %1176 = vmatprep.subr.mxu0 0.0
    %1177 = vmatpush1.msra.mxu0 %v1065
    %1178 = vmatprep.subr.mxu0 0.0
    %1179 = vmatpush2.msra.mxu0 0.0
    %1180 = vmatprep.subr.mxu0 0.0
    %1181 = vmatpush2.msra.mxu0 0.0
    %1182 = vmatprep.subr.mxu0 0.0
    %1183 = vmatpush2.msra.mxu0 0.0
    %1184 = vmatprep.subr.mxu0 0.0
    %1185 = vmatpush2.msra.mxu0 0.0
    %1186 = vmatprep.subr.mxu0 0.0
    %1187 = vmatpush2.msra.mxu0 0.0
    %1188 = vmatprep.subr.mxu0 0.0
    %1189 = vmatpush2.msra.mxu0 0.0
    %1190 = vmatprep.subr.mxu0 0.0
    %1191 = vmatpush2.msra.mxu0 0.0
    %1192 = vmatprep.subr.mxu0 0.0
    %1193 = vmatpush2.msra.mxu0 0.0
    %1194 = vmatprep.subr.mxu0 0.0
    %1195 = vmatpush2.msra.mxu0 0.0
    %1196 = vmatprep.subr.mxu0 0.0
    %1197 = vmatpush2.msra.mxu0 0.0
    %1198 = vmatprep.subr.mxu0 0.0
    %1199 = vmatpush2.msra.mxu0 0.0
    %1200 = vmatprep.subr.mxu0 0.0
    %1201 = vmatpush2.msra.mxu0 0.0
    %1202 = vmatprep.subr.mxu0 0.0
    %1203 = vmatpush2.msra.mxu0 0.0
    %1204 = vmatprep.subr.mxu0 0.0
    %1205 = vmatpush2.msra.mxu0 0.0
    %1206 = vmatprep.subr.mxu0 0.0
    %1207 = vmatpush2.msra.mxu0 0.0
    %1208 = vmatprep.subr.mxu0 0.0
    %1209 = vmatpush2.msra.mxu0 0.0
    %1210 = vmatprep.mubr.f32.mxu0 0.0
    %1211 = vmatmul.mubr.f32.gmra.mxu0 %v1144
    %v1212 = vpop.f32.mrf.mxu0
    %v1213 = vadd.f32 %v1067, %v1212
    %v1214 = vpop.f32.mrf.mxu0
    %1215 = vdwg.mxu0
    %v1216 = vmax.f32 %v1213, 0.0
    %1217 = vst.msk [vmem:[#allocation5] sm:$0xff] %vm867, %v1043
    %1218 = vrot.lane.b32.xlu0 %v1141, 4
    %v1219 = vpop.permute.xlu0 %1218
    %1222 = vrot.lane.b32.xlu0 %v1216, 20
    %v1223 = vpop.permute.xlu0 %1222
    %v1225 = vsel %vm834, %v1026, %v1219
    %vm1226 = vcmask 162816
    %v1227 = vsel %vm1226, %v1225, %v1223
    %vm1228 = vcmask 171008
    %v1229 = vsel %vm1228, %v1227, 0.0
    %1230 = vst [vmem:[%s14] sm:$0x1] %v1229
    // Predicated region
    $region54: #{_forward_fused.1} parent=1 // pred_check
      _
    $region55: #{_forward_fused.1} parent=1 // pred_check_branch
      %1232 = sbr.rel (0) target = $region57
    $region56: #{_forward_fused.1} parent=1 // pred_region
      %s1234 = ssub.s32 128, 128
      %1235 = vsyncadd [#allocation6], %s1234
      %s1237 = sshll.u32 [#allocation5], 4
      %s1238 = int_to_ptr.vmem [resolvable:$true] %s1237
      %1240 = dma.vmem_to_hbm [thread:$0]  %s1238, 128, %s13, [#allocation6]
    $region57: #{_forward_fused.1} parent=1 // pred_fallthru
      _
    // Predicated region
    $region58: #{_forward_fused.1} parent=1 // pred_check
      _
    $region59: #{_forward_fused.1} parent=1 // pred_check_branch
      %1242 = sbr.rel (0) target = $region61
    $region60: #{_forward_fused.1} parent=1 // pred_region
      _
    $region61: #{_forward_fused.1} parent=1 // pred_fallthru
      _
    // Predicated region
    $region62: #{_forward_fused.1} parent=1 // pred_check
      _
    $region63: #{_forward_fused.1} parent=1 // pred_check_branch
      %1244 = sbr.rel (0) target = $region65
    $region64: #{_forward_fused.1} parent=1 // pred_region
      %1245 = dma.done [#allocation6], 128
    $region65: #{_forward_fused.1} parent=1 // pred_fallthru
      _
    // Predicated region
    $region66: #{_forward_fused.1} parent=1 // pred_check
      _
    $region67: #{_forward_fused.1} parent=1 // pred_check_branch
      %1247 = sbr.rel (0) target = $region69
    $region68: #{_forward_fused.1} parent=1 // pred_region
      _
    $region69: #{_forward_fused.1} parent=1 // pred_fallthru
      _
    %1248 = vsyncpa [#allocation6], 1

</llo_original>
